<compile_context>
chip_gen: v7x
topology: tpu7x:2x2x1
jax: 0.10.0
libtpu: 0.0.40
codegen_flags: <defaults>
</compile_context>

<pallas_src>
import numpy as np
import jax
import jax.numpy as jnp
from jax.experimental import pallas as pl
from jax.experimental.pallas import tpu as pltpu

_LANE = 128          # padded classifier-head width (lane-dense)
_NEG_BIG = -1e30     # bias value for the padded logit lanes


def _lang_predict_loss_kernel(
    enc_ref,    # (Bt, Tt, D) f32   encoding tile
    wk_ref,     # (1, D)      f32   pooling key weight (head_count = 1)
    bk_ref,     # (1, 1)      f32   pooling key bias
    wv_ref,     # (D, D)      f32   pooling value weight, (in, out)
    bv_ref,     # (1, D)      f32
    w1_ref,     # (D, D)      f32   classifier layer 1, (in, out)
    b1_ref,     # (1, D)      f32
    w2_ref,     # (D, D)      f32   classifier layer 2, (in, out)
    b2_ref,     # (1, D)      f32
    w3_ref,     # (D, 128)    f32   classifier layer 3, lane-padded
    b3_ref,     # (1, 128)    f32   padded lanes hold -1e30
    lang_ref,   # (Bt, 1)     i32   target class index per sample
    loss_ref,   # (Bt, 128)   f32   per-sample CE loss, broadcast across lanes
    m_sc,       # (Bt, 1)     f32   running max of pooling scores
    l_sc,       # (Bt, 1)     f32   running softmax denominator
    acc_sc,     # (Bt, D)     f32   running sum_t exp(score_t - m) * enc_t
):
    t = pl.program_id(1)

    @pl.when(t == 0)
    def _init():
        m_sc[...] = jnp.full(m_sc.shape, -jnp.inf, m_sc.dtype)
        l_sc[...] = jnp.zeros(l_sc.shape, l_sc.dtype)
        acc_sc[...] = jnp.zeros(acc_sc.shape, acc_sc.dtype)

    enc = enc_ref[...]                                           # (Bt, Tt, D)
    D = enc.shape[-1]

    # Single-head pooling scores for this T tile: enc . wk + bk  -> (Bt, Tt).
    # Lane reduce over D (XLU); tiny compared with the streamed enc DMA.
    scores = jnp.sum(enc * wk_ref[...].reshape(1, 1, D), axis=-1) + bk_ref[...]

    # Online softmax update (flash-style) over the T axis.
    m_prev = m_sc[...]
    m_new = jnp.maximum(m_prev, jnp.max(scores, axis=-1, keepdims=True))
    alpha = jnp.exp(m_prev - m_new)                              # (Bt, 1)
    p = jnp.exp(scores - m_new)                                  # (Bt, Tt)
    l_sc[...] = alpha * l_sc[...] + jnp.sum(p, axis=-1, keepdims=True)
    # Fused pooling: accumulate sum_t p_t * enc_t.  Value projection applied
    # once after the softmax (exact because the softmax weights sum to 1).
    acc_sc[...] = alpha * acc_sc[...] + jnp.sum(p[:, :, None] * enc, axis=1)
    m_sc[...] = m_new

    @pl.when(t == pl.num_programs(1) - 1)
    def _finalize():
        inv_l = pl.reciprocal(l_sc[...], approx=True)            # EUP slot
        pooled = acc_sc[...] * inv_l                             # (Bt, D)

        # Value projection, then the 3-layer classifier MLP (all on MXU).
        ctx = jnp.dot(pooled, wv_ref[...],
                      preferred_element_type=jnp.float32) + bv_ref[...]
        h = jnp.maximum(
            jnp.dot(ctx, w1_ref[...], preferred_element_type=jnp.float32)
            + b1_ref[...], 0.0)
        h = jnp.maximum(
            jnp.dot(h, w2_ref[...], preferred_element_type=jnp.float32)
            + b2_ref[...], 0.0)
        logits = jnp.dot(h, w3_ref[...],
                         preferred_element_type=jnp.float32) + b3_ref[...]   # (Bt, 128)

        # Per-sample cross entropy (reduction='none').  Padded lanes carry
        # logit == -1e30, so they never win the max nor contribute to the LSE.
        mx = jnp.max(logits, axis=-1, keepdims=True)
        lse = jnp.log(jnp.sum(jnp.exp(logits - mx), axis=-1, keepdims=True)) + mx
        onehot = jax.lax.broadcasted_iota(jnp.int32, logits.shape, 1) == lang_ref[...]
        tgt = jnp.sum(jnp.where(onehot, logits, 0.0), axis=-1, keepdims=True)
        # Lane-dense store: broadcast the per-row loss across all 128 lanes.
        loss_ref[...] = jnp.broadcast_to(lse - tgt, loss_ref.shape)


def _pick_tile(n, target):
    if n <= target:
        return n
    return target if n % target == 0 else n


def lang_predict_loss(encoding, params, lang_ix, *, b_tile=None, t_tile=None):
    """encoding: (B, T, D) f32, lang_ix: (B,) int class indices. Returns (B,) f32."""
    B, T, D = encoding.shape
    L = params["w3"].shape[-1]
    assert L <= _LANE

    # Tile sizes sized so double-buffered enc tiles + resident DxD weights stay
    # well inside v7x's 64 MiB VMEM (also fine on v5e/v6e).
    b_tile = _pick_tile(B, 32) if b_tile is None else b_tile
    t_tile = _pick_tile(T, 128) if t_tile is None else t_tile
    assert B % b_tile == 0 and T % t_tile == 0
    assert b_tile == B or b_tile % 8 == 0
    n_b, n_t = B // b_tile, T // t_tile

    # Lane-dense classifier head: pad (D, L) -> (D, 128); padded bias lanes are
    # a large negative constant so the padded logits are inert in the CE.
    w3p = jnp.pad(params["w3"], ((0, 0), (0, _LANE - L)))
    b3p = jnp.pad(params["b3"], ((0, 0), (0, _LANE - L)),
                  constant_values=_NEG_BIG)

    lang2d = lang_ix.reshape(B, 1).astype(jnp.int32)

    const = lambda b, t: (0, 0)   # weights stay VMEM-resident across the grid
    grid_spec = pltpu.PrefetchScalarGridSpec(
        num_scalar_prefetch=0,
        grid=(n_b, n_t),
        in_specs=[
            pl.BlockSpec((b_tile, t_tile, D), lambda b, t: (b, t, 0)),  # enc
            pl.BlockSpec((1, D), const),        # wk
            pl.BlockSpec((1, 1), const),        # bk
            pl.BlockSpec((D, D), const),        # wv
            pl.BlockSpec((1, D), const),        # bv
            pl.BlockSpec((D, D), const),        # w1
            pl.BlockSpec((1, D), const),        # b1
            pl.BlockSpec((D, D), const),        # w2
            pl.BlockSpec((1, D), const),        # b2
            pl.BlockSpec((D, _LANE), const),    # w3 (lane-padded)
            pl.BlockSpec((1, _LANE), const),    # b3 (lane-padded)
            pl.BlockSpec((b_tile, 1), lambda b, t: (b, 0)),             # lang
        ],
        out_specs=pl.BlockSpec((b_tile, _LANE), lambda b, t: (b, 0)),
        scratch_shapes=[
            pltpu.VMEM((b_tile, 1), jnp.float32),   # running max
            pltpu.VMEM((b_tile, 1), jnp.float32),   # running denominator
            pltpu.VMEM((b_tile, D), jnp.float32),   # running weighted sum
        ],
    )

    flops = 4 * B * T * D + 6 * B * D * D + 2 * B * D * _LANE
    bytes_accessed = 4 * (B * T * D + 3 * D * D + D * _LANE
                          + 5 * D + 1 + _LANE + B + B * _LANE)
    cost = pl.CostEstimate(
        flops=int(flops),
        transcendentals=int(B * (T + _LANE + 4)),
        bytes_accessed=int(bytes_accessed),
    )

    out = pl.pallas_call(
        _lang_predict_loss_kernel,
        out_shape=jax.ShapeDtypeStruct((B, _LANE), jnp.float32),
        grid_spec=grid_spec,
        compiler_params=pltpu.CompilerParams(
            dimension_semantics=("parallel", "arbitrary"),
            vmem_limit_bytes=48 * 1024 * 1024,
        ),
        cost_estimate=cost,
    )(encoding, params["wk"], params["bk"], params["wv"], params["bv"],
      params["w1"], params["b1"], params["w2"], params["b2"],
      w3p, b3p, lang2d)

    return out[:, 0]


def _ref_loss(encoding, p, lang_ix):
    """Pure-JAX reference (unfused, unpadded) for verification."""
    scores = jnp.einsum("btd,d->bt", encoding, p["wk"][0]) + p["bk"][0, 0]
    attn = jax.nn.softmax(scores, axis=-1)
    value = jnp.einsum("btd,de->bte", encoding, p["wv"]) + p["bv"][0]
    context = jnp.einsum("bt,btd->bd", attn, value)
    h = jax.nn.relu(context @ p["w1"] + p["b1"][0])
    h = jax.nn.relu(h @ p["w2"] + p["b2"][0])
    logits = h @ p["w3"] + p["b3"][0]
    lse = jax.nn.logsumexp(logits, axis=-1)
    tgt = logits[jnp.arange(logits.shape[0]), lang_ix]
    return lse - tgt


if __name__ == "__main__":
    # Small but TPU-friendly shapes: D is a multiple of 128 (lane-dense) and
    # the grid is exercised on both axes (2 B-tiles x 2 T-tiles).
    B, T, D = 16, 32, 128
    B_TILE, T_TILE = 8, 16
    tgt_langs = ["en_XX", "fr_XX", "de_DE", "zh_CN", "es_XX", "ar_AR"]
    L = len(tgt_langs)

    # Synthetic FAIRSEQ_LANGUAGE_CODES (mBART-50 style ids) — host-side glue,
    # identical role to the dict lookup in the PyTorch forward.
    FAIRSEQ_LANGUAGE_CODES = {
        "ar_AR": 250001, "de_DE": 250003, "en_XX": 250004,
        "es_XX": 250005, "fr_XX": 250008, "zh_CN": 250025,
    }
    lang_code_to_ix = {
        v: tgt_langs.index(k)
        for k, v in FAIRSEQ_LANGUAGE_CODES.items() if k in tgt_langs
    }

    key = jax.random.PRNGKey(0)
    ks = jax.random.split(key, 12)

    def lin(k, fan_in, shape):
        bound = 1.0 / np.sqrt(fan_in)
        return jax.random.uniform(k, shape, jnp.float32, -bound, bound)

    params = {
        "wk": lin(ks[0], D, (1, D)),
        "bk": lin(ks[1], D, (1, 1)),
        "wv": lin(ks[2], D, (D, D)),
        "bv": lin(ks[3], D, (1, D)),
        "w1": lin(ks[4], D, (D, D)),
        "b1": lin(ks[5], D, (1, D)),
        "w2": lin(ks[6], D, (D, D)),
        "b2": lin(ks[7], D, (1, D)),
        "w3": lin(ks[8], D, (D, L)),
        "b3": lin(ks[9], D, (1, L)),
    }

    encoding = jax.random.normal(ks[10], (B, T, D), jnp.float32)

    # Raw fairseq language-code ids for this batch, mapped on host (as in the
    # PyTorch forward's dict lookup).
    all_codes = sorted(lang_code_to_ix.keys())
    lang_codes = [all_codes[i % len(all_codes)] for i in range(B)]
    lang_ix = jnp.array([lang_code_to_ix[c] for c in lang_codes], dtype=jnp.int32)

    loss = jax.block_until_ready(
        lang_predict_loss(encoding, params, lang_ix, b_tile=B_TILE, t_tile=T_TILE))
    ref = _ref_loss(encoding, params, lang_ix)

    assert loss.shape == (B,)
    # Tolerance accounts for the EUP approximate reciprocal in the softmax
    # normalization; real bugs produce O(1) errors.
    np.testing.assert_allclose(np.asarray(loss), np.asarray(ref),
                               rtol=1e-2, atol=1e-2)
    print("KERNEL_OK")
</pallas_src>

<mosaic_0001>
module attributes {stable_mosaic.version = 11 : i64} {
  func.func @_lang_predict_loss_kernel(%arg0: i32, %arg1: i32, %arg2: memref<8x16x128xf32, #tpu.memory_space<vmem>>, %arg3: memref<1x128xf32, #tpu.memory_space<vmem>>, %arg4: memref<1x1xf32, #tpu.memory_space<vmem>>, %arg5: memref<128x128xf32, #tpu.memory_space<vmem>>, %arg6: memref<1x128xf32, #tpu.memory_space<vmem>>, %arg7: memref<128x128xf32, #tpu.memory_space<vmem>>, %arg8: memref<1x128xf32, #tpu.memory_space<vmem>>, %arg9: memref<128x128xf32, #tpu.memory_space<vmem>>, %arg10: memref<1x128xf32, #tpu.memory_space<vmem>>, %arg11: memref<128x128xf32, #tpu.memory_space<vmem>>, %arg12: memref<1x128xf32, #tpu.memory_space<vmem>>, %arg13: memref<8x1xi32, #tpu.memory_space<vmem>>, %arg14: memref<8x128xf32, #tpu.memory_space<vmem>>, %arg15: memref<8x1xf32, #tpu.memory_space<vmem>>, %arg16: memref<8x1xf32, #tpu.memory_space<vmem>>, %arg17: memref<8x128xf32, #tpu.memory_space<vmem>>) attributes {dimension_semantics = [#tpu.dimension_semantics<parallel>, #tpu.dimension_semantics<arbitrary>], iteration_bounds = array<i64: 2, 2>, scalar_prefetch = 0 : i64, scratch_operands = 3 : i64, tpu.core_type = #tpu.core_type<tc>, window_params = [{transform_indices = @transform_0, window_bounds = array<i64: 8, 16, 128>}, {pipeline_mode = #tpu.pipeline_mode<synchronous>, transform_indices = @transform_1, window_bounds = array<i64: 1, 128>}, {pipeline_mode = #tpu.pipeline_mode<synchronous>, transform_indices = @transform_2, window_bounds = array<i64: 1, 1>}, {pipeline_mode = #tpu.pipeline_mode<synchronous>, transform_indices = @transform_3, window_bounds = array<i64: 128, 128>}, {pipeline_mode = #tpu.pipeline_mode<synchronous>, transform_indices = @transform_4, window_bounds = array<i64: 1, 128>}, {pipeline_mode = #tpu.pipeline_mode<synchronous>, transform_indices = @transform_5, window_bounds = array<i64: 128, 128>}, {pipeline_mode = #tpu.pipeline_mode<synchronous>, transform_indices = @transform_6, window_bounds = array<i64: 1, 128>}, {pipeline_mode = #tpu.pipeline_mode<synchronous>, transform_indices = @transform_7, window_bounds = array<i64: 128, 128>}, {pipeline_mode = #tpu.pipeline_mode<synchronous>, transform_indices = @transform_8, window_bounds = array<i64: 1, 128>}, {pipeline_mode = #tpu.pipeline_mode<synchronous>, transform_indices = @transform_9, window_bounds = array<i64: 128, 128>}, {pipeline_mode = #tpu.pipeline_mode<synchronous>, transform_indices = @transform_10, window_bounds = array<i64: 1, 128>}, {transform_indices = @transform_11, window_bounds = array<i64: 8, 1>}, {transform_indices = @transform_12, window_bounds = array<i64: 8, 128>}]} {
    %c0_i32 = arith.constant 0 : i32
    %0 = arith.cmpi eq, %arg1, %c0_i32 : i32
    %1 = arith.extui %0 : i1 to i32
    %c0_i32_0 = arith.constant 0 : i32
    %2 = arith.cmpi ne, %1, %c0_i32_0 : i32
    scf.if %2 {
      %cst_23 = arith.constant 0xFF800000 : f32
      %40 = vector.broadcast %cst_23 : f32 to vector<8x1xf32>
      %c0_24 = arith.constant 0 : index
      %c0_25 = arith.constant 0 : index
      %41 = vector.load %arg15[%c0_24, %c0_25] : memref<8x1xf32, #tpu.memory_space<vmem>>, vector<8x1xf32>
      tpu.vector_store %arg15[%c0_24, %c0_25], %40 {strides = array<i32>} : memref<8x1xf32, #tpu.memory_space<vmem>>, vector<8x1xf32>,
      %cst_26 = arith.constant 0.000000e+00 : f32
      %42 = vector.broadcast %cst_26 : f32 to vector<8x1xf32>
      %c0_27 = arith.constant 0 : index
      %c0_28 = arith.constant 0 : index
      %43 = vector.load %arg16[%c0_27, %c0_28] : memref<8x1xf32, #tpu.memory_space<vmem>>, vector<8x1xf32>
      tpu.vector_store %arg16[%c0_27, %c0_28], %42 {strides = array<i32>} : memref<8x1xf32, #tpu.memory_space<vmem>>, vector<8x1xf32>,
      %cst_29 = arith.constant 0.000000e+00 : f32
      %44 = vector.broadcast %cst_29 : f32 to vector<8x128xf32>
      %c0_30 = arith.constant 0 : index
      %c0_31 = arith.constant 0 : index
      %45 = vector.load %arg17[%c0_30, %c0_31] : memref<8x128xf32, #tpu.memory_space<vmem>>, vector<8x128xf32>
      tpu.vector_store %arg17[%c0_30, %c0_31], %44 {strides = array<i32>} : memref<8x128xf32, #tpu.memory_space<vmem>>, vector<8x128xf32>,
    } else {
    }
    %c0 = arith.constant 0 : index
    %c0_1 = arith.constant 0 : index
    %c0_2 = arith.constant 0 : index
    %3 = vector.load %arg2[%c0, %c0_1, %c0_2] : memref<8x16x128xf32, #tpu.memory_space<vmem>>, vector<8x16x128xf32>
    %c0_3 = arith.constant 0 : index
    %c0_4 = arith.constant 0 : index
    %4 = vector.load %arg3[%c0_3, %c0_4] : memref<1x128xf32, #tpu.memory_space<vmem>>, vector<1x128xf32>
    %5 = vector.shape_cast %4 : vector<1x128xf32> to vector<1x1x128xf32>
    %6 = vector.broadcast %5 : vector<1x1x128xf32> to vector<8x16x128xf32>
    %7 = arith.mulf %3, %6 : vector<8x16x128xf32>
    %cst = arith.constant dense<0.000000e+00> : vector<8x16xf32>
    %8 = vector.multi_reduction <add>, %7, %cst [2] : vector<8x16x128xf32> to vector<8x16xf32>
    %c0_5 = arith.constant 0 : index
    %c0_6 = arith.constant 0 : index
    %9 = vector.load %arg4[%c0_5, %c0_6] : memref<1x1xf32, #tpu.memory_space<vmem>>, vector<1x1xf32>
    %10 = vector.broadcast %9 : vector<1x1xf32> to vector<8x16xf32>
    %11 = arith.addf %8, %10 : vector<8x16xf32>
    %c0_7 = arith.constant 0 : index
    %c0_8 = arith.constant 0 : index
    %12 = vector.load %arg15[%c0_7, %c0_8] : memref<8x1xf32, #tpu.memory_space<vmem>>, vector<8x1xf32>
    %cst_9 = arith.constant dense<0xFF800000> : vector<8xf32>
    %13 = vector.multi_reduction <maximumf>, %11, %cst_9 [1] : vector<8x16xf32> to vector<8xf32>
    %14 = vector.shape_cast %13 : vector<8xf32> to vector<8x1xf32>
    %15 = arith.maximumf %12, %14 : vector<8x1xf32>
    %16 = arith.subf %12, %15 : vector<8x1xf32>
    %17 = math.exp %16 : vector<8x1xf32>
    %18 = vector.broadcast %15 : vector<8x1xf32> to vector<8x16xf32>
    %19 = arith.subf %11, %18 : vector<8x16xf32>
    %20 = math.exp %19 : vector<8x16xf32>
    %c0_10 = arith.constant 0 : index
    %c0_11 = arith.constant 0 : index
    %21 = vector.load %arg16[%c0_10, %c0_11] : memref<8x1xf32, #tpu.memory_space<vmem>>, vector<8x1xf32>
    %22 = arith.mulf %17, %21 : vector<8x1xf32>
    %cst_12 = arith.constant dense<0.000000e+00> : vector<8xf32>
    %23 = vector.multi_reduction <add>, %20, %cst_12 [1] : vector<8x16xf32> to vector<8xf32>
    %24 = vector.shape_cast %23 : vector<8xf32> to vector<8x1xf32>
    %25 = arith.addf %22, %24 : vector<8x1xf32>
    %c0_13 = arith.constant 0 : index
    %c0_14 = arith.constant 0 : index
    %26 = vector.load %arg16[%c0_13, %c0_14] : memref<8x1xf32, #tpu.memory_space<vmem>>, vector<8x1xf32>
    tpu.vector_store %arg16[%c0_13, %c0_14], %25 {strides = array<i32>} : memref<8x1xf32, #tpu.memory_space<vmem>>, vector<8x1xf32>,
    %c0_15 = arith.constant 0 : index
    %c0_16 = arith.constant 0 : index
    %27 = vector.load %arg17[%c0_15, %c0_16] : memref<8x128xf32, #tpu.memory_space<vmem>>, vector<8x128xf32>
    %28 = vector.broadcast %17 : vector<8x1xf32> to vector<8x128xf32>
    %29 = arith.mulf %28, %27 : vector<8x128xf32>
    %30 = vector.shape_cast %20 : vector<8x16xf32> to vector<8x16x1xf32>
    %31 = vector.broadcast %30 : vector<8x16x1xf32> to vector<8x16x128xf32>
    %32 = arith.mulf %31, %3 : vector<8x16x128xf32>
    %cst_17 = arith.constant dense<0.000000e+00> : vector<8x128xf32>
    %33 = vector.multi_reduction <add>, %32, %cst_17 [1] : vector<8x16x128xf32> to vector<8x128xf32>
    %34 = arith.addf %29, %33 : vector<8x128xf32>
    %c0_18 = arith.constant 0 : index
    %c0_19 = arith.constant 0 : index
    %35 = vector.load %arg17[%c0_18, %c0_19] : memref<8x128xf32, #tpu.memory_space<vmem>>, vector<8x128xf32>
    tpu.vector_store %arg17[%c0_18, %c0_19], %34 {strides = array<i32>} : memref<8x128xf32, #tpu.memory_space<vmem>>, vector<8x128xf32>,
    %c0_20 = arith.constant 0 : index
    %c0_21 = arith.constant 0 : index
    %36 = vector.load %arg15[%c0_20, %c0_21] : memref<8x1xf32, #tpu.memory_space<vmem>>, vector<8x1xf32>
    tpu.vector_store %arg15[%c0_20, %c0_21], %15 {strides = array<i32>} : memref<8x1xf32, #tpu.memory_space<vmem>>, vector<8x1xf32>,
    %c1_i32 = arith.constant 1 : i32
    %37 = arith.cmpi eq, %arg1, %c1_i32 : i32
    %38 = arith.extui %37 : i1 to i32
    %c0_i32_22 = arith.constant 0 : i32
    %39 = arith.cmpi ne, %38, %c0_i32_22 : i32
    scf.if %39 {
      %c0_23 = arith.constant 0 : index
      %c0_24 = arith.constant 0 : index
      %40 = vector.load %arg16[%c0_23, %c0_24] : memref<8x1xf32, #tpu.memory_space<vmem>>, vector<8x1xf32>
      %41 = tpu.reciprocal %40 {approx = true} : vector<8x1xf32> -> vector<8x1xf32>
      %c0_25 = arith.constant 0 : index
      %c0_26 = arith.constant 0 : index
      %42 = vector.load %arg17[%c0_25, %c0_26] : memref<8x128xf32, #tpu.memory_space<vmem>>, vector<8x128xf32>
      %43 = vector.broadcast %41 : vector<8x1xf32> to vector<8x128xf32>
      %44 = arith.mulf %42, %43 : vector<8x128xf32>
      %c0_27 = arith.constant 0 : index
      %c0_28 = arith.constant 0 : index
      %45 = vector.load %arg5[%c0_27, %c0_28] : memref<128x128xf32, #tpu.memory_space<vmem>>, vector<128x128xf32>
      %cst_29 = arith.constant dense<0.000000e+00> : vector<8x128xf32>
      %46 = tpu.matmul %44, %45, %cst_29 {dimension_numbers = #tpu.dot_dimension_numbers<[1], [0], [0], [1], [0, 0, 1, 1], [], []>} : vector<8x128xf32>, vector<128x128xf32>, vector<8x128xf32> -> vector<8x128xf32>
      %c0_30 = arith.constant 0 : index
      %c0_31 = arith.constant 0 : index
      %47 = vector.load %arg6[%c0_30, %c0_31] : memref<1x128xf32, #tpu.memory_space<vmem>>, vector<1x128xf32>
      %48 = vector.broadcast %47 : vector<1x128xf32> to vector<8x128xf32>
      %49 = arith.addf %46, %48 : vector<8x128xf32>
      %c0_32 = arith.constant 0 : index
      %c0_33 = arith.constant 0 : index
      %50 = vector.load %arg7[%c0_32, %c0_33] : memref<128x128xf32, #tpu.memory_space<vmem>>, vector<128x128xf32>
      %cst_34 = arith.constant dense<0.000000e+00> : vector<8x128xf32>
      %51 = tpu.matmul %49, %50, %cst_34 {dimension_numbers = #tpu.dot_dimension_numbers<[1], [0], [0], [1], [0, 0, 1, 1], [], []>} : vector<8x128xf32>, vector<128x128xf32>, vector<8x128xf32> -> vector<8x128xf32>
      %c0_35 = arith.constant 0 : index
      %c0_36 = arith.constant 0 : index
      %52 = vector.load %arg8[%c0_35, %c0_36] : memref<1x128xf32, #tpu.memory_space<vmem>>, vector<1x128xf32>
      %53 = vector.broadcast %52 : vector<1x128xf32> to vector<8x128xf32>
      %54 = arith.addf %51, %53 : vector<8x128xf32>
      %cst_37 = arith.constant 0.000000e+00 : f32
      %55 = vector.broadcast %cst_37 : f32 to vector<8x128xf32>
      %56 = arith.maximumf %54, %55 : vector<8x128xf32>
      %c0_38 = arith.constant 0 : index
      %c0_39 = arith.constant 0 : index
      %57 = vector.load %arg9[%c0_38, %c0_39] : memref<128x128xf32, #tpu.memory_space<vmem>>, vector<128x128xf32>
      %cst_40 = arith.constant dense<0.000000e+00> : vector<8x128xf32>
      %58 = tpu.matmul %56, %57, %cst_40 {dimension_numbers = #tpu.dot_dimension_numbers<[1], [0], [0], [1], [0, 0, 1, 1], [], []>} : vector<8x128xf32>, vector<128x128xf32>, vector<8x128xf32> -> vector<8x128xf32>
      %c0_41 = arith.constant 0 : index
      %c0_42 = arith.constant 0 : index
      %59 = vector.load %arg10[%c0_41, %c0_42] : memref<1x128xf32, #tpu.memory_space<vmem>>, vector<1x128xf32>
      %60 = vector.broadcast %59 : vector<1x128xf32> to vector<8x128xf32>
      %61 = arith.addf %58, %60 : vector<8x128xf32>
      %cst_43 = arith.constant 0.000000e+00 : f32
      %62 = vector.broadcast %cst_43 : f32 to vector<8x128xf32>
      %63 = arith.maximumf %61, %62 : vector<8x128xf32>
      %c0_44 = arith.constant 0 : index
      %c0_45 = arith.constant 0 : index
      %64 = vector.load %arg11[%c0_44, %c0_45] : memref<128x128xf32, #tpu.memory_space<vmem>>, vector<128x128xf32>
      %cst_46 = arith.constant dense<0.000000e+00> : vector<8x128xf32>
      %65 = tpu.matmul %63, %64, %cst_46 {dimension_numbers = #tpu.dot_dimension_numbers<[1], [0], [0], [1], [0, 0, 1, 1], [], []>} : vector<8x128xf32>, vector<128x128xf32>, vector<8x128xf32> -> vector<8x128xf32>
      %c0_47 = arith.constant 0 : index
      %c0_48 = arith.constant 0 : index
      %66 = vector.load %arg12[%c0_47, %c0_48] : memref<1x128xf32, #tpu.memory_space<vmem>>, vector<1x128xf32>
      %67 = vector.broadcast %66 : vector<1x128xf32> to vector<8x128xf32>
      %68 = arith.addf %65, %67 : vector<8x128xf32>
      %cst_49 = arith.constant dense<0xFF800000> : vector<8xf32>
      %69 = vector.multi_reduction <maximumf>, %68, %cst_49 [1] : vector<8x128xf32> to vector<8xf32>
      %70 = vector.shape_cast %69 : vector<8xf32> to vector<8x1xf32>
      %71 = vector.broadcast %70 : vector<8x1xf32> to vector<8x128xf32>
      %72 = arith.subf %68, %71 : vector<8x128xf32>
      %73 = math.exp %72 : vector<8x128xf32>
      %cst_50 = arith.constant dense<0.000000e+00> : vector<8xf32>
      %74 = vector.multi_reduction <add>, %73, %cst_50 [1] : vector<8x128xf32> to vector<8xf32>
      %75 = vector.shape_cast %74 : vector<8xf32> to vector<8x1xf32>
      %76 = math.log %75 : vector<8x1xf32>
      %77 = arith.addf %76, %70 : vector<8x1xf32>
      %78 = tpu.iota {dimensions = array<i32: 1>} : vector<8x128xi32>
      %c0_51 = arith.constant 0 : index
      %c0_52 = arith.constant 0 : index
      %79 = vector.load %arg13[%c0_51, %c0_52] : memref<8x1xi32, #tpu.memory_space<vmem>>, vector<8x1xi32>
      %80 = vector.broadcast %79 : vector<8x1xi32> to vector<8x128xi32>
      %81 = arith.cmpi eq, %78, %80 : vector<8x128xi32>
      %cst_53 = arith.constant 0.000000e+00 : f32
      %82 = vector.broadcast %cst_53 : f32 to vector<8x128xf32>
      %83 = arith.select %81, %68, %82 : vector<8x128xi1>, vector<8x128xf32>
      %cst_54 = arith.constant dense<0.000000e+00> : vector<8xf32>
      %84 = vector.multi_reduction <add>, %83, %cst_54 [1] : vector<8x128xf32> to vector<8xf32>
      %85 = vector.shape_cast %84 : vector<8xf32> to vector<8x1xf32>
      %86 = arith.subf %77, %85 : vector<8x1xf32>
      %87 = vector.shape_cast %86 : vector<8x1xf32> to vector<8x1xf32>
      %88 = vector.broadcast %87 : vector<8x1xf32> to vector<8x128xf32>
      %c0_55 = arith.constant 0 : index
      %c0_56 = arith.constant 0 : index
      %89 = vector.load %arg14[%c0_55, %c0_56] : memref<8x128xf32, #tpu.memory_space<vmem>>, vector<8x128xf32>
      tpu.vector_store %arg14[%c0_55, %c0_56], %88 {strides = array<i32>} : memref<8x128xf32, #tpu.memory_space<vmem>>, vector<8x128xf32>,
    } else {
    }
    return
  }
  func.func @transform_0(%arg0: i32, %arg1: i32) -> (i32, i32, i32) {
    %c0_i32 = arith.constant 0 : i32
    %c0_i32_0 = arith.constant 0 : i32
    return %arg0, %arg1, %c0_i32 : i32, i32, i32
  }
  func.func @transform_1(%arg0: i32, %arg1: i32) -> (i32, i32) {
    %c0_i32 = arith.constant 0 : i32
    %c0_i32_0 = arith.constant 0 : i32
    %c0_i32_1 = arith.constant 0 : i32
    return %c0_i32, %c0_i32_0 : i32, i32
  }
  func.func @transform_2(%arg0: i32, %arg1: i32) -> (i32, i32) {
    %c0_i32 = arith.constant 0 : i32
    %c0_i32_0 = arith.constant 0 : i32
    %c0_i32_1 = arith.constant 0 : i32
    return %c0_i32, %c0_i32_0 : i32, i32
  }
  func.func @transform_3(%arg0: i32, %arg1: i32) -> (i32, i32) {
    %c0_i32 = arith.constant 0 : i32
    %c0_i32_0 = arith.constant 0 : i32
    %c0_i32_1 = arith.constant 0 : i32
    return %c0_i32, %c0_i32_0 : i32, i32
  }
  func.func @transform_4(%arg0: i32, %arg1: i32) -> (i32, i32) {
    %c0_i32 = arith.constant 0 : i32
    %c0_i32_0 = arith.constant 0 : i32
    %c0_i32_1 = arith.constant 0 : i32
    return %c0_i32, %c0_i32_0 : i32, i32
  }
  func.func @transform_5(%arg0: i32, %arg1: i32) -> (i32, i32) {
    %c0_i32 = arith.constant 0 : i32
    %c0_i32_0 = arith.constant 0 : i32
    %c0_i32_1 = arith.constant 0 : i32
    return %c0_i32, %c0_i32_0 : i32, i32
  }
  func.func @transform_6(%arg0: i32, %arg1: i32) -> (i32, i32) {
    %c0_i32 = arith.constant 0 : i32
    %c0_i32_0 = arith.constant 0 : i32
    %c0_i32_1 = arith.constant 0 : i32
    return %c0_i32, %c0_i32_0 : i32, i32
  }
  func.func @transform_7(%arg0: i32, %arg1: i32) -> (i32, i32) {
    %c0_i32 = arith.constant 0 : i32
    %c0_i32_0 = arith.constant 0 : i32
    %c0_i32_1 = arith.constant 0 : i32
    return %c0_i32, %c0_i32_0 : i32, i32
  }
  func.func @transform_8(%arg0: i32, %arg1: i32) -> (i32, i32) {
    %c0_i32 = arith.constant 0 : i32
    %c0_i32_0 = arith.constant 0 : i32
    %c0_i32_1 = arith.constant 0 : i32
    return %c0_i32, %c0_i32_0 : i32, i32
  }
  func.func @transform_9(%arg0: i32, %arg1: i32) -> (i32, i32) {
    %c0_i32 = arith.constant 0 : i32
    %c0_i32_0 = arith.constant 0 : i32
    %c0_i32_1 = arith.constant 0 : i32
    return %c0_i32, %c0_i32_0 : i32, i32
  }
  func.func @transform_10(%arg0: i32, %arg1: i32) -> (i32, i32) {
    %c0_i32 = arith.constant 0 : i32
    %c0_i32_0 = arith.constant 0 : i32
    %c0_i32_1 = arith.constant 0 : i32
    return %c0_i32, %c0_i32_0 : i32, i32
  }
  func.func @transform_11(%arg0: i32, %arg1: i32) -> (i32, i32) {
    %c0_i32 = arith.constant 0 : i32
    %c0_i32_0 = arith.constant 0 : i32
    return %arg0, %c0_i32 : i32, i32
  }
  func.func @transform_12(%arg0: i32, %arg1: i32) -> (i32, i32) {
    %c0_i32 = arith.constant 0 : i32
    %c0_i32_0 = arith.constant 0 : i32
    return %arg0, %c0_i32 : i32, i32
  }
}

</mosaic_0001>

<llo_original>
// kernel: tpu_custom_call.1
$region0: #{tpu_custom_call.1}
  #allocation0 [shape = 'u32[]', space=smem, size = 0x4, offset = 0x4, fixed_abs, tag = 'smem constant byte address 0x4 - core index']
  #allocation1 [shape = 'u32[144,128]{1,0:T(1,128)}', space=vmem, size = 0x12000, scoped, tag = 'internal scratch']
  #allocation2 [shape = 'f32[8,1]{1,0:T(8,128)}', space=vmem, size = 0x1000, scoped, tag = 'scratch operand']
  #allocation3 [shape = 'f32[8,1]{1,0:T(8,128)}', space=vmem, size = 0x1000, scoped, tag = 'scratch operand']
  #allocation4 [shape = 'f32[8,128]{1,0:T(8,128)}', space=vmem, size = 0x1000, scoped, tag = 'scratch operand']
  #allocation5 [shape = 'f32[1,1]{1,0:T(1,128)S(1)}', space=vmem, size = 0x200, scoped, tag = 'scoped memory for tpu_custom_call.1']
  #allocation16 [shape = 's32[]', space=sflag, size = 0x4, offset = 0, fixed_abs, tag = 'sflag constant byte address 0x0 - dummy sync flag']
  %s0 = inlined_call_operand.hbm [shape: f32[16,32,128], index: 0, kind: input, shape index: {}]
  %s1 = inlined_call_operand.vmem [shape: f32[1,128], index: 1, kind: input, shape index: {}]
  %s2 = inlined_call_operand.<no memory space> [shape: f32[1,1], index: 2, kind: input, shape index: {}]
  %s3 = inlined_call_operand.hbm [shape: f32[128,128], index: 3, kind: input, shape index: {}]
  %s4 = inlined_call_operand.vmem [shape: f32[1,128], index: 4, kind: input, shape index: {}]
  %s5 = inlined_call_operand.hbm [shape: f32[128,128], index: 5, kind: input, shape index: {}]
  %s6 = inlined_call_operand.vmem [shape: f32[1,128], index: 6, kind: input, shape index: {}]
  %s7 = inlined_call_operand.hbm [shape: f32[128,128], index: 7, kind: input, shape index: {}]
  %s8 = inlined_call_operand.vmem [shape: f32[1,128], index: 8, kind: input, shape index: {}]
  %s9 = inlined_call_operand.hbm [shape: f32[128,128], index: 9, kind: input, shape index: {}]
  %s10 = inlined_call_operand.vmem [shape: f32[1,128], index: 10, kind: input, shape index: {}]
  %s11 = inlined_call_operand.vmem [shape: s32[16,1], index: 11, kind: input, shape index: {}]
  %s12 = inlined_call_operand.hbm [shape: f32[16,128], index: 12, kind: output, shape index: {}]
  %s13 = sld [smem:[#allocation0]]
  $region109: #{tpu_custom_call.1} parent=0
    _
  %s15 = ssub.s32 1, %s13
  %s16 = scalar_select 0, %s15, %s13
  %v17 = vstv %s2
  %18 = vst [vmem:[#allocation5] sm:$0x1] %v17
  $region1: #{tpu_custom_call.1} parent=0
    #allocation6 [shape = 'u8[131072]{0}', space=vmem, size = 0x20000, scoped, tag = 'input window, operand 0']
    #allocation7 [shape = 's32[2]{0}', space=sflag, size = 0x8, scoped, tag = 'scoped memory for tpu_custom_call.1']
    #allocation8 [shape = 's32[2]{0}', space=sflag, size = 0x8, scoped, tag = 'scoped memory for tpu_custom_call.1']
    #allocation9 [shape = 'u8[65536]{0}', space=vmem, size = 0x10000, scoped, tag = 'input window, operand 3, single buffered']
    #allocation10 [shape = 's32[1]{0}', space=sflag, size = 0x4, scoped, tag = 'scoped memory for tpu_custom_call.1']
    #allocation11 [shape = 'u8[65536]{0}', space=vmem, size = 0x10000, scoped, tag = 'input window, operand 5, single buffered']
    #allocation12 [shape = 'u8[65536]{0}', space=vmem, size = 0x10000, scoped, tag = 'input window, operand 7, single buffered']
    #allocation13 [shape = 's32[1]{0}', space=sflag, size = 0x4, scoped, tag = 'scoped memory for tpu_custom_call.1']
    #allocation14 [shape = 'u8[65536]{0}', space=vmem, size = 0x10000, scoped, tag = 'input window, operand 9, single buffered']
    #allocation15 [shape = 'u8[8192]{0}', space=vmem, size = 0x2000, scoped, tag = 'output window, operand 0']
    %19 = vsyncpa [#allocation7], 0
    %s20 = scalar_lea.sflag [#allocation7], 1
    %21 = vsyncpa %s20, 0
    %22 = vsyncpa [#allocation10], 0
    %23 = vsyncpa [#allocation13], 0
    %24 = vsyncpa [#allocation8], 0
    %s25 = scalar_lea.sflag [#allocation8], 1
    %26 = vsyncpa %s25, 0
    loop: start=0, step=1, limit=6
    $region2: #{tpu_custom_call.1} parent=1 // loop_pre_header
      _
    $region3: #{tpu_custom_call.1} parent=1 // loop_header
      %s28 = sphi 0, %s32
      %p29 = scmp.ge.s32.totalorder %s28, 6
      %s35 = sphi 0, %s47
      %s36 = sphi 0, %s43
      %s37 = sphi 0, %s35
      %s38 = sphi 0, %s36
      %s39 = sphi 0, %s37
      %s40 = sphi 0, %s38
      %s52 = sphi 0, %s54
      %s55 = sphi 0, %s52
      %s56 = sphi 0, %s55
      %s72 = sphi 0, %s56
      %s76 = sphi 0, %s76
      %s78 = sphi 0, %s76
      %s79 = sphi 0, %s78
      %s93 = sphi 0, %s79
      %s97 = sphi 0, %s97
      %s99 = sphi 0, %s97
      %s100 = sphi 0, %s99
      %s114 = sphi 0, %s100
      %s118 = sphi 0, %s118
      %s120 = sphi 0, %s118
      %s121 = sphi 0, %s120
      %s135 = sphi 0, %s121
      %s139 = sphi 0, %s139
      %s141 = sphi 0, %s139
      %s142 = sphi 0, %s141
      %s156 = sphi 0, %s142
      %s160 = sphi 0, %s160
      %s162 = sphi 0, %s160
      %s163 = sphi 0, %s162
      %s177 = sphi 0, %s163
      %s181 = sphi 0, %s181
      %s183 = sphi 0, %s181
      %s184 = sphi 0, %s183
      %s198 = sphi 0, %s184
      %s202 = sphi 0, %s202
      %s204 = sphi 0, %s202
      %s205 = sphi 0, %s204
      %s219 = sphi 0, %s205
      %s223 = sphi 0, %s223
      %s225 = sphi 0, %s223
      %s226 = sphi 0, %s225
      %s240 = sphi 0, %s226
      %s244 = sphi 0, %s244
      %s246 = sphi 0, %s244
      %s247 = sphi 0, %s246
      %s261 = sphi 0, %s247
      %s265 = sphi 0, %s265
      %s267 = sphi 0, %s265
      %s268 = sphi 0, %s267
      %s282 = sphi 0, %s268
      %s288 = sphi 0, %s290
      %s291 = sphi 0, %s288
      %s292 = sphi 0, %s291
      %s308 = sphi 0, %s292
      %s314 = sphi 0, %s316
      %s317 = sphi 0, %s314
      %s318 = sphi 0, %s317
      %s334 = sphi 0, %s318
    $region4: #{tpu_custom_call.1} parent=1 // loop_header_branch
      %31 = sbr.rel (%p29) target = $region8
    $region5: #{tpu_custom_call.1} parent=1 // loop_body
      %s33 = ssub.s32 %s28, 1
      %s34 = ssub.s32 %s28, 2
      %s41 = sadd.s32 1, %s36
      %p42 = scmp.ge.s32.totalorder %s41, 2
      %s43 = scalar_select %p42, 0, %s41
      %s44 = sadd.s32 1, %s35
      %s45 = scalar_select %p42, %s44, %s35
      %p46 = scmp.ge.s32.totalorder %s45, 2
      %s47 = scalar_select %p46, 0, %s45
      %s48 = ssub.s32 %s35, %s47
      %s49 = ssub.s32 %s36, %s43
      %s50 = sor.u32 %s48, %s49
      %p51 = scmp.eq.s32.totalorder %s50, 0
      %s53 = sadd.s32 %s52, 1
      %s54 = scalar_select %p51, %s52, %s53
      %p57 = pneg %p51
      %p58 = scmp.eq.s32.totalorder %s28, 3
      %p59 = por %p57, %p58
      %p60 = scmp.ne.s32.totalorder %s52, %s55
      %p61 = scmp.eq.s32.totalorder %s28, 0
      %p62 = por %p60, %p61
      %p63 = scmp.ne.s32.totalorder %s52, %s55
      %p64 = scmp.eq.s32.totalorder %s33, 3
      %p65 = por %p63, %p64
      %p66 = scmp.ne.s32.totalorder %s55, %s56
      %p67 = scmp.eq.s32.totalorder %s33, 0
      %p68 = por %p66, %p67
      %p69 = scmp.ne.s32.totalorder %s55, %s56
      %p70 = scmp.eq.s32.totalorder %s34, 3
      %p71 = por %p69, %p70
      %p73 = scmp.ne.s32.totalorder %s56, %s72
      %p74 = scmp.eq.s32.totalorder %s34, 0
      %p75 = por %p73, %p74
      %s77 = sadd.s32 %s76, 1
      %p80 = scmp.eq.s32.totalorder %s28, 3
      %p81 = scmp.ne.s32.totalorder %s76, %s78
      %p82 = scmp.eq.s32.totalorder %s28, 0
      %p83 = por %p81, %p82
      %p84 = scmp.ne.s32.totalorder %s76, %s78
      %p85 = scmp.eq.s32.totalorder %s33, 3
      %p86 = por %p84, %p85
      %p87 = scmp.ne.s32.totalorder %s78, %s79
      %p88 = scmp.eq.s32.totalorder %s33, 0
      %p89 = por %p87, %p88
      %p90 = scmp.ne.s32.totalorder %s78, %s79
      %p91 = scmp.eq.s32.totalorder %s34, 3
      %p92 = por %p90, %p91
      %p94 = scmp.ne.s32.totalorder %s79, %s93
      %p95 = scmp.eq.s32.totalorder %s34, 0
      %p96 = por %p94, %p95
      %s98 = sadd.s32 %s97, 1
      %p101 = scmp.eq.s32.totalorder %s28, 3
      %p102 = scmp.ne.s32.totalorder %s97, %s99
      %p103 = scmp.eq.s32.totalorder %s28, 0
      %p104 = por %p102, %p103
      %p105 = scmp.ne.s32.totalorder %s97, %s99
      %p106 = scmp.eq.s32.totalorder %s33, 3
      %p107 = por %p105, %p106
      %p108 = scmp.ne.s32.totalorder %s99, %s100
      %p109 = scmp.eq.s32.totalorder %s33, 0
      %p110 = por %p108, %p109
      %p111 = scmp.ne.s32.totalorder %s99, %s100
      %p112 = scmp.eq.s32.totalorder %s34, 3
      %p113 = por %p111, %p112
      %p115 = scmp.ne.s32.totalorder %s100, %s114
      %p116 = scmp.eq.s32.totalorder %s34, 0
      %p117 = por %p115, %p116
      %s119 = sadd.s32 %s118, 1
      %p122 = scmp.eq.s32.totalorder %s28, 3
      %p123 = scmp.ne.s32.totalorder %s118, %s120
      %p124 = scmp.eq.s32.totalorder %s28, 0
      %p125 = por %p123, %p124
      %p126 = scmp.ne.s32.totalorder %s118, %s120
      %p127 = scmp.eq.s32.totalorder %s33, 3
      %p128 = por %p126, %p127
      %p129 = scmp.ne.s32.totalorder %s120, %s121
      %p130 = scmp.eq.s32.totalorder %s33, 0
      %p131 = por %p129, %p130
      %p132 = scmp.ne.s32.totalorder %s120, %s121
      %p133 = scmp.eq.s32.totalorder %s34, 3
      %p134 = por %p132, %p133
      %p136 = scmp.ne.s32.totalorder %s121, %s135
      %p137 = scmp.eq.s32.totalorder %s34, 0
      %p138 = por %p136, %p137
      %s140 = sadd.s32 %s139, 1
      %p143 = scmp.eq.s32.totalorder %s28, 3
      %p144 = scmp.ne.s32.totalorder %s139, %s141
      %p145 = scmp.eq.s32.totalorder %s28, 0
      %p146 = por %p144, %p145
      %p147 = scmp.ne.s32.totalorder %s139, %s141
      %p148 = scmp.eq.s32.totalorder %s33, 3
      %p149 = por %p147, %p148
      %p150 = scmp.ne.s32.totalorder %s141, %s142
      %p151 = scmp.eq.s32.totalorder %s33, 0
      %p152 = por %p150, %p151
      %p153 = scmp.ne.s32.totalorder %s141, %s142
      %p154 = scmp.eq.s32.totalorder %s34, 3
      %p155 = por %p153, %p154
      %p157 = scmp.ne.s32.totalorder %s142, %s156
      %p158 = scmp.eq.s32.totalorder %s34, 0
      %p159 = por %p157, %p158
      %s161 = sadd.s32 %s160, 1
      %p164 = scmp.eq.s32.totalorder %s28, 3
      %p165 = scmp.ne.s32.totalorder %s160, %s162
      %p166 = scmp.eq.s32.totalorder %s28, 0
      %p167 = por %p165, %p166
      %p168 = scmp.ne.s32.totalorder %s160, %s162
      %p169 = scmp.eq.s32.totalorder %s33, 3
      %p170 = por %p168, %p169
      %p171 = scmp.ne.s32.totalorder %s162, %s163
      %p172 = scmp.eq.s32.totalorder %s33, 0
      %p173 = por %p171, %p172
      %p174 = scmp.ne.s32.totalorder %s162, %s163
      %p175 = scmp.eq.s32.totalorder %s34, 3
      %p176 = por %p174, %p175
      %p178 = scmp.ne.s32.totalorder %s163, %s177
      %p179 = scmp.eq.s32.totalorder %s34, 0
      %p180 = por %p178, %p179
      %s182 = sadd.s32 %s181, 1
      %p185 = scmp.eq.s32.totalorder %s28, 3
      %p186 = scmp.ne.s32.totalorder %s181, %s183
      %p187 = scmp.eq.s32.totalorder %s28, 0
      %p188 = por %p186, %p187
      %p189 = scmp.ne.s32.totalorder %s181, %s183
      %p190 = scmp.eq.s32.totalorder %s33, 3
      %p191 = por %p189, %p190
      %p192 = scmp.ne.s32.totalorder %s183, %s184
      %p193 = scmp.eq.s32.totalorder %s33, 0
      %p194 = por %p192, %p193
      %p195 = scmp.ne.s32.totalorder %s183, %s184
      %p196 = scmp.eq.s32.totalorder %s34, 3
      %p197 = por %p195, %p196
      %p199 = scmp.ne.s32.totalorder %s184, %s198
      %p200 = scmp.eq.s32.totalorder %s34, 0
      %p201 = por %p199, %p200
      %s203 = sadd.s32 %s202, 1
      %p206 = scmp.eq.s32.totalorder %s28, 3
      %p207 = scmp.ne.s32.totalorder %s202, %s204
      %p208 = scmp.eq.s32.totalorder %s28, 0
      %p209 = por %p207, %p208
      %p210 = scmp.ne.s32.totalorder %s202, %s204
      %p211 = scmp.eq.s32.totalorder %s33, 3
      %p212 = por %p210, %p211
      %p213 = scmp.ne.s32.totalorder %s204, %s205
      %p214 = scmp.eq.s32.totalorder %s33, 0
      %p215 = por %p213, %p214
      %p216 = scmp.ne.s32.totalorder %s204, %s205
      %p217 = scmp.eq.s32.totalorder %s34, 3
      %p218 = por %p216, %p217
      %p220 = scmp.ne.s32.totalorder %s205, %s219
      %p221 = scmp.eq.s32.totalorder %s34, 0
      %p222 = por %p220, %p221
      %s224 = sadd.s32 %s223, 1
      %p227 = scmp.eq.s32.totalorder %s28, 3
      %p228 = scmp.ne.s32.totalorder %s223, %s225
      %p229 = scmp.eq.s32.totalorder %s28, 0
      %p230 = por %p228, %p229
      %p231 = scmp.ne.s32.totalorder %s223, %s225
      %p232 = scmp.eq.s32.totalorder %s33, 3
      %p233 = por %p231, %p232
      %p234 = scmp.ne.s32.totalorder %s225, %s226
      %p235 = scmp.eq.s32.totalorder %s33, 0
      %p236 = por %p234, %p235
      %p237 = scmp.ne.s32.totalorder %s225, %s226
      %p238 = scmp.eq.s32.totalorder %s34, 3
      %p239 = por %p237, %p238
      %p241 = scmp.ne.s32.totalorder %s226, %s240
      %p242 = scmp.eq.s32.totalorder %s34, 0
      %p243 = por %p241, %p242
      %s245 = sadd.s32 %s244, 1
      %p248 = scmp.eq.s32.totalorder %s28, 3
      %p249 = scmp.ne.s32.totalorder %s244, %s246
      %p250 = scmp.eq.s32.totalorder %s28, 0
      %p251 = por %p249, %p250
      %p252 = scmp.ne.s32.totalorder %s244, %s246
      %p253 = scmp.eq.s32.totalorder %s33, 3
      %p254 = por %p252, %p253
      %p255 = scmp.ne.s32.totalorder %s246, %s247
      %p256 = scmp.eq.s32.totalorder %s33, 0
      %p257 = por %p255, %p256
      %p258 = scmp.ne.s32.totalorder %s246, %s247
      %p259 = scmp.eq.s32.totalorder %s34, 3
      %p260 = por %p258, %p259
      %p262 = scmp.ne.s32.totalorder %s247, %s261
      %p263 = scmp.eq.s32.totalorder %s34, 0
      %p264 = por %p262, %p263
      %s266 = sadd.s32 %s265, 1
      %p269 = scmp.eq.s32.totalorder %s28, 3
      %p270 = scmp.ne.s32.totalorder %s265, %s267
      %p271 = scmp.eq.s32.totalorder %s28, 0
      %p272 = por %p270, %p271
      %p273 = scmp.ne.s32.totalorder %s265, %s267
      %p274 = scmp.eq.s32.totalorder %s33, 3
      %p275 = por %p273, %p274
      %p276 = scmp.ne.s32.totalorder %s267, %s268
      %p277 = scmp.eq.s32.totalorder %s33, 0
      %p278 = por %p276, %p277
      %p279 = scmp.ne.s32.totalorder %s267, %s268
      %p280 = scmp.eq.s32.totalorder %s34, 3
      %p281 = por %p279, %p280
      %p283 = scmp.ne.s32.totalorder %s268, %s282
      %p284 = scmp.eq.s32.totalorder %s34, 0
      %p285 = por %p283, %p284
      %s286 = ssub.s32 %s35, %s47
      %p287 = scmp.eq.s32.totalorder %s286, 0
      %s289 = sadd.s32 %s288, 1
      %s290 = scalar_select %p287, %s288, %s289
      %p293 = pneg %p287
      %p294 = scmp.eq.s32.totalorder %s28, 3
      %p295 = por %p293, %p294
      %p296 = scmp.ne.s32.totalorder %s288, %s291
      %p297 = scmp.eq.s32.totalorder %s28, 0
      %p298 = por %p296, %p297
      %p299 = scmp.ne.s32.totalorder %s288, %s291
      %p300 = scmp.eq.s32.totalorder %s33, 3
      %p301 = por %p299, %p300
      %p302 = scmp.ne.s32.totalorder %s291, %s292
      %p303 = scmp.eq.s32.totalorder %s33, 0
      %p304 = por %p302, %p303
      %p305 = scmp.ne.s32.totalorder %s291, %s292
      %p306 = scmp.eq.s32.totalorder %s34, 3
      %p307 = por %p305, %p306
      %p309 = scmp.ne.s32.totalorder %s292, %s308
      %p310 = scmp.eq.s32.totalorder %s34, 0
      %p311 = por %p309, %p310
      %s312 = ssub.s32 %s35, %s47
      %p313 = scmp.eq.s32.totalorder %s312, 0
      %s315 = sadd.s32 %s314, 1
      %s316 = scalar_select %p313, %s314, %s315
      %p319 = pneg %p313
      %p320 = scmp.eq.s32.totalorder %s28, 3
      %p321 = por %p319, %p320
      %p322 = scmp.ne.s32.totalorder %s314, %s317
      %p323 = scmp.eq.s32.totalorder %s28, 0
      %p324 = por %p322, %p323
      %p325 = scmp.ne.s32.totalorder %s314, %s317
      %p326 = scmp.eq.s32.totalorder %s33, 3
      %p327 = por %p325, %p326
      %p328 = scmp.ne.s32.totalorder %s317, %s318
      %p329 = scmp.eq.s32.totalorder %s33, 0
      %p330 = por %p328, %p329
      %p331 = scmp.ne.s32.totalorder %s317, %s318
      %p332 = scmp.eq.s32.totalorder %s34, 3
      %p333 = por %p331, %p332
      %p335 = scmp.ne.s32.totalorder %s318, %s334
      %p336 = scmp.eq.s32.totalorder %s34, 0
      %p337 = por %p335, %p336
      %p338 = scmp.le.s32.totalorder 1, %s28
      %p339 = scmp.lt.s32.totalorder %s28, 5
      %p340 = pnand %p338, %p339
      %p341 = pneg %p340
      // Predicated region
      $region9: #{tpu_custom_call.1} parent=5 // pred_check
        _
      $region10: #{tpu_custom_call.1} parent=5 // pred_check_branch
        %343 = sbr.rel (%p340) target = $region12
      $region11: #{tpu_custom_call.1} parent=5 // pred_region
        %s344 = ssub.s32 %s28, 1
        // Predicated region
        $region13: #{tpu_custom_call.1} parent=11 // pred_check
          %p345 = pneg %p89
        $region14: #{tpu_custom_call.1} parent=11 // pred_check_branch
          %347 = sbr.rel (%p345) target = $region16
        $region15: #{tpu_custom_call.1} parent=11 // pred_region
          _
        $region16: #{tpu_custom_call.1} parent=11 // pred_fallthru
          _
        // Predicated region
        $region17: #{tpu_custom_call.1} parent=11 // pred_check
          %p348 = pneg %p110
        $region18: #{tpu_custom_call.1} parent=11 // pred_check_branch
          %350 = sbr.rel (%p348) target = $region20
        $region19: #{tpu_custom_call.1} parent=11 // pred_region
          _
        $region20: #{tpu_custom_call.1} parent=11 // pred_fallthru
          _
        // Predicated region
        $region21: #{tpu_custom_call.1} parent=11 // pred_check
          %p351 = pneg %p131
        $region22: #{tpu_custom_call.1} parent=11 // pred_check_branch
          %353 = sbr.rel (%p351) target = $region24
        $region23: #{tpu_custom_call.1} parent=11 // pred_region
          %s355 = ssub.s32 2048, 2048
          %356 = vsyncadd [#allocation10], %s355
          %s357 = sshll.u32 [#allocation9], 4
          %s358 = int_to_ptr.vmem [resolvable:$true] %s357
          %363 = dma.hbm_to_vmem [thread:$0]  %s3, 2048, %s358, [#allocation10], 128, 128, 8
        $region24: #{tpu_custom_call.1} parent=11 // pred_fallthru
          _
        // Predicated region
        $region25: #{tpu_custom_call.1} parent=11 // pred_check
          %p364 = pneg %p152
        $region26: #{tpu_custom_call.1} parent=11 // pred_check_branch
          %366 = sbr.rel (%p364) target = $region28
        $region27: #{tpu_custom_call.1} parent=11 // pred_region
          _
        $region28: #{tpu_custom_call.1} parent=11 // pred_fallthru
          _
        // Predicated region
        $region29: #{tpu_custom_call.1} parent=11 // pred_check
          %p367 = pneg %p173
        $region30: #{tpu_custom_call.1} parent=11 // pred_check_branch
          %369 = sbr.rel (%p367) target = $region32
        $region31: #{tpu_custom_call.1} parent=11 // pred_region
          %s371 = ssub.s32 2048, 2048
          %372 = vsyncadd [#allocation10], %s371
          %s373 = sshll.u32 [#allocation11], 4
          %s374 = int_to_ptr.vmem [resolvable:$true] %s373
          %379 = dma.hbm_to_vmem [thread:$0]  %s5, 2048, %s374, [#allocation10], 128, 128, 8
        $region32: #{tpu_custom_call.1} parent=11 // pred_fallthru
          _
        // Predicated region
        $region33: #{tpu_custom_call.1} parent=11 // pred_check
          %p380 = pneg %p194
        $region34: #{tpu_custom_call.1} parent=11 // pred_check_branch
          %382 = sbr.rel (%p380) target = $region36
        $region35: #{tpu_custom_call.1} parent=11 // pred_region
          _
        $region36: #{tpu_custom_call.1} parent=11 // pred_fallthru
          _
        // Predicated region
        $region37: #{tpu_custom_call.1} parent=11 // pred_check
          %p383 = pneg %p215
        $region38: #{tpu_custom_call.1} parent=11 // pred_check_branch
          %385 = sbr.rel (%p383) target = $region40
        $region39: #{tpu_custom_call.1} parent=11 // pred_region
          %s387 = ssub.s32 2048, 2048
          %388 = vsyncadd [#allocation13], %s387
          %s389 = sshll.u32 [#allocation12], 4
          %s390 = int_to_ptr.vmem [resolvable:$true] %s389
          %395 = dma.hbm_to_vmem [thread:$0]  %s7, 2048, %s390, [#allocation13], 128, 128, 8
        $region40: #{tpu_custom_call.1} parent=11 // pred_fallthru
          _
        // Predicated region
        $region41: #{tpu_custom_call.1} parent=11 // pred_check
          %p396 = pneg %p236
        $region42: #{tpu_custom_call.1} parent=11 // pred_check_branch
          %398 = sbr.rel (%p396) target = $region44
        $region43: #{tpu_custom_call.1} parent=11 // pred_region
          _
        $region44: #{tpu_custom_call.1} parent=11 // pred_fallthru
          _
        // Predicated region
        $region45: #{tpu_custom_call.1} parent=11 // pred_check
          %p399 = pneg %p257
        $region46: #{tpu_custom_call.1} parent=11 // pred_check_branch
          %401 = sbr.rel (%p399) target = $region48
        $region47: #{tpu_custom_call.1} parent=11 // pred_region
          %s403 = ssub.s32 2048, 2048
          %404 = vsyncadd [#allocation13], %s403
          %s405 = sshll.u32 [#allocation14], 4
          %s406 = int_to_ptr.vmem [resolvable:$true] %s405
          %411 = dma.hbm_to_vmem [thread:$0]  %s9, 2048, %s406, [#allocation13], 128, 128, 8
        $region48: #{tpu_custom_call.1} parent=11 // pred_fallthru
          _
        // Predicated region
        $region49: #{tpu_custom_call.1} parent=11 // pred_check
          %p412 = pneg %p278
        $region50: #{tpu_custom_call.1} parent=11 // pred_check_branch
          %414 = sbr.rel (%p412) target = $region52
        $region51: #{tpu_custom_call.1} parent=11 // pred_region
          _
        $region52: #{tpu_custom_call.1} parent=11 // pred_fallthru
          _
      $region12: #{tpu_custom_call.1} parent=5 // pred_fallthru
        _
      %p415 = scmp.lt.s32.totalorder %s28, 4
      // Predicated region
      $region53: #{tpu_custom_call.1} parent=5 // pred_check
        %p416 = pneg %p415
      $region54: #{tpu_custom_call.1} parent=5 // pred_check_branch
        %418 = sbr.rel (%p416) target = $region56
      $region55: #{tpu_custom_call.1} parent=5 // pred_region
        // Predicated region
        $region57: #{tpu_custom_call.1} parent=55 // pred_check
          %p419 = pneg %p62
        $region58: #{tpu_custom_call.1} parent=55 // pred_check_branch
          %421 = sbr.rel (%p419) target = $region60
        $region59: #{tpu_custom_call.1} parent=55 // pred_region
          #allocation17 [shape = 'u32[6]{0}', space=smem, size = 0x18, scoped, tag = 'DMA stride descriptor']
          %s422 = sand.u32 %s52, 1
          %s423 = scalar_lea.sflag [#allocation7], %s422
          %s424 = sand.u32 %s52, 1
          %s425 = smul.addr %s424, 128
          %s426 = scalar_lea.vmem [#allocation6], %s425
          %s427 = smul.u32 8, %s35
          %s428 = smul.u32 2, %s36
          %s430 = ssub.s32 2048, 2048
          %431 = vsyncadd %s423, %s430
          %s432 = smul.addr %s427, 4
          %s433 = sadd.s32 %s428, %s432
          %s434 = smul.addr %s433, 128
          %s435 = scalar_lea.hbm %s0, %s434
          %s437 = sshll.u32 1, 14
          %s438 = sxor.u32 4294967295, %s437
          %s440 = sld [smem:[#allocation0]]
          %s441 = sadd.s32 2, %s440
          %s443 = sshll.u32 7, 26
          %s444 = sxor.u32 4294967295, %s443
          %s445 = sand.u32 0, %s444
          %s446 = sshll.u32 %s441, 26
          %s447 = sor.u32 %s445, %s446
          %s448 = sshll.u32 %s426, 4
          %s449 = int_to_ptr.vmem [resolvable:$true] %s448
          %455 = sst [smem:[#allocation17]] 512
          %s456 = scalar_lea.smem [#allocation17], 1
          %457 = sst [smem:[%s456]] 256
          %s458 = scalar_lea.smem [#allocation17], 2
          %459 = sst [smem:[%s458]] 2
          %s460 = scalar_lea.smem [#allocation17], 3
          %461 = sst [smem:[%s460]] 128
          %s462 = scalar_lea.smem [#allocation17], 4
          %463 = sst [smem:[%s462]] 128
          %s464 = scalar_lea.smem [#allocation17], 5
          %465 = sst [smem:[%s464]] 8
          %467 = dma.general %s435, 2048, %s449, %s423, [#allocation16], [#allocation17], %s447, 0
        $region60: #{tpu_custom_call.1} parent=55 // pred_fallthru
          _
        // Predicated region
        $region61: #{tpu_custom_call.1} parent=55 // pred_check
          %p468 = pneg %p298
        $region62: #{tpu_custom_call.1} parent=55 // pred_check_branch
          %470 = sbr.rel (%p468) target = $region64
        $region63: #{tpu_custom_call.1} parent=55 // pred_region
          %p471 = scmp.lt.s32.totalorder %s35, 1
          %s472 = scalar_select %p471, %s35, 1
          %s473 = smul.addr %s472, 8
          %s474 = scalar_lea.vmem %s11, %s473
        $region64: #{tpu_custom_call.1} parent=55 // pred_fallthru
          _
      $region56: #{tpu_custom_call.1} parent=5 // pred_fallthru
        _
      %p475 = scmp.le.s32.totalorder 1, %s28
      %p476 = scmp.lt.s32.totalorder %s28, 5
      %p477 = pnand %p475, %p476
      %p478 = pneg %p477
      // Predicated region
      $region65: #{tpu_custom_call.1} parent=5 // pred_check
        _
      $region66: #{tpu_custom_call.1} parent=5 // pred_check_branch
        %480 = sbr.rel (%p477) target = $region68
      $region67: #{tpu_custom_call.1} parent=5 // pred_region
        %s481 = ssub.s32 %s28, 1
        %s482 = sand.u32 %s55, 1
        %s483 = scalar_lea.sflag [#allocation7], %s482
        %s484 = sand.u32 %s55, 1
        %s485 = smul.addr %s484, 128
        %s486 = scalar_lea.vmem [#allocation6], %s485
        // Predicated region
        $region69: #{tpu_custom_call.1} parent=67 // pred_check
          %p487 = pneg %p68
        $region70: #{tpu_custom_call.1} parent=67 // pred_check_branch
          %489 = sbr.rel (%p487) target = $region72
        $region71: #{tpu_custom_call.1} parent=67 // pred_region
          %490 = dma.done %s483, 2048
        $region72: #{tpu_custom_call.1} parent=67 // pred_fallthru
          _
        // Predicated region
        $region73: #{tpu_custom_call.1} parent=67 // pred_check
          %p491 = pneg %p131
        $region74: #{tpu_custom_call.1} parent=67 // pred_check_branch
          %493 = sbr.rel (%p491) target = $region76
        $region75: #{tpu_custom_call.1} parent=67 // pred_region
          %494 = dma.done [#allocation10], 2048
        $region76: #{tpu_custom_call.1} parent=67 // pred_fallthru
          _
        // Predicated region
        $region77: #{tpu_custom_call.1} parent=67 // pred_check
          %p495 = pneg %p173
        $region78: #{tpu_custom_call.1} parent=67 // pred_check_branch
          %497 = sbr.rel (%p495) target = $region80
        $region79: #{tpu_custom_call.1} parent=67 // pred_region
          %498 = dma.done [#allocation10], 2048
        $region80: #{tpu_custom_call.1} parent=67 // pred_fallthru
          _
        // Predicated region
        $region81: #{tpu_custom_call.1} parent=67 // pred_check
          %p499 = pneg %p215
        $region82: #{tpu_custom_call.1} parent=67 // pred_check_branch
          %501 = sbr.rel (%p499) target = $region84
        $region83: #{tpu_custom_call.1} parent=67 // pred_region
          %502 = dma.done [#allocation13], 2048
        $region84: #{tpu_custom_call.1} parent=67 // pred_fallthru
          _
        // Predicated region
        $region85: #{tpu_custom_call.1} parent=67 // pred_check
          %p503 = pneg %p257
        $region86: #{tpu_custom_call.1} parent=67 // pred_check_branch
          %505 = sbr.rel (%p503) target = $region88
        $region87: #{tpu_custom_call.1} parent=67 // pred_region
          %506 = dma.done [#allocation13], 2048
        $region88: #{tpu_custom_call.1} parent=67 // pred_fallthru
          _
        %s507 = sand.u32 %s55, 1
        %s508 = scalar_lea.sflag [#allocation7], %s507
        %s509 = sand.u32 %s55, 1
        %s510 = smul.addr %s509, 128
        %s511 = scalar_lea.vmem [#allocation6], %s510
        %p512 = pneg %p68
        %p513 = pneg %p65
        %p514 = pneg %p89
        %p515 = pneg %p86
        %p516 = pneg %p110
        %p517 = pneg %p107
        %p518 = pneg %p131
        %p519 = pneg %p128
        %p520 = pneg %p152
        %p521 = pneg %p149
        %p522 = pneg %p173
        %p523 = pneg %p170
        %p524 = pneg %p194
        %p525 = pneg %p191
        %p526 = pneg %p215
        %p527 = pneg %p212
        %p528 = pneg %p236
        %p529 = pneg %p233
        %p530 = pneg %p257
        %p531 = pneg %p254
        %p532 = pneg %p278
        %p533 = pneg %p275
        %p534 = scmp.lt.s32.totalorder %s37, 1
        %s535 = scalar_select %p534, %s37, 1
        %s536 = smul.addr %s535, 8
        %s537 = scalar_lea.vmem %s11, %s536
        %p538 = pneg %p304
        %p539 = pneg %p301
        %p540 = pneg %p330
        %p541 = pneg %p327
        %s542 = sand.u32 %s317, 1
        %s543 = scalar_lea.sflag [#allocation8], %s542
        %s544 = sand.u32 %s317, 1
        %s545 = smul.addr %s544, 8
        %s546 = scalar_lea.vmem [#allocation15], %s545
        %s547 = smul.u32 8, %s37
        %s548 = smul.u32 2, %s38
        %p549 = scmp.lt.s32.totalorder %s37, 1
        %s550 = scalar_select %p549, %s37, 1
        %s551 = smul.addr %s550, 8
        %s552 = scalar_lea.vmem %s11, %s551
        %p553 = scmp.eq.s32.totalorder %s38, 0
        // Predicated region
        $region89: #{tpu_custom_call.1} parent=67 // pred_check
          %p554 = pneg %p553
        $region90: #{tpu_custom_call.1} parent=67 // pred_check_branch
          %556 = sbr.rel (%p554) target = $region92
        $region91: #{tpu_custom_call.1} parent=67 // pred_region
          %vm557 = vcmask 7168
          %558 = vst.msk [vmem:[#allocation2] sm:$0xff] %vm557, -inf
          %559 = vst.msk [vmem:[#allocation3] sm:$0xff] %vm557, 0.0
          %560 = vst [vmem:[#allocation4] sm:$0xff] 0.0
        $region92: #{tpu_custom_call.1} parent=67 // pred_fallthru
          _
        %v561 = vld [vmem:[%s486] sm:$0xff]
        %v562 = vld [vmem:[%s486 + $0x8] sm:$0xff]
        %v563 = vld [vmem:[%s486 + $0x10] sm:$0xff]
        %v564 = vld [vmem:[%s486 + $0x18] sm:$0xff]
        %v565 = vld [vmem:[%s486 + $0x20] sm:$0xff]
        %v566 = vld [vmem:[%s486 + $0x28] sm:$0xff]
        %v567 = vld [vmem:[%s486 + $0x30] sm:$0xff]
        %v568 = vld [vmem:[%s486 + $0x38] sm:$0xff]
        %v569 = vld [vmem:[%s486 + $0x40] sm:$0xff]
        %v570 = vld [vmem:[%s486 + $0x48] sm:$0xff]
        %v571 = vld [vmem:[%s486 + $0x50] sm:$0xff]
        %v572 = vld [vmem:[%s486 + $0x58] sm:$0xff]
        %v573 = vld [vmem:[%s486 + $0x60] sm:$0xff]
        %v574 = vld [vmem:[%s486 + $0x68] sm:$0xff]
        %v575 = vld [vmem:[%s486 + $0x70] sm:$0xff]
        %v576 = vld [vmem:[%s486 + $0x78] sm:$0xff]
        %v577 = vld [vmem:[%s1] sm:$0x1]
        %v579 = vlaneseq
        %v580 = vshrl.u32 %v579, 7
        %v581 = vsub.s32 0, %v580
        %v582 = vrot.slane %v577, %v581
        %v584 = vmul.f32 %v561, %v582
        %v585 = vmul.f32 %v562, %v582
        %v586 = vmul.f32 %v563, %v582
        %v587 = vmul.f32 %v564, %v582
        %v588 = vmul.f32 %v565, %v582
        %v589 = vmul.f32 %v566, %v582
        %v590 = vmul.f32 %v567, %v582
        %v591 = vmul.f32 %v568, %v582
        %v592 = vmul.f32 %v569, %v582
        %v593 = vmul.f32 %v570, %v582
        %v594 = vmul.f32 %v571, %v582
        %v595 = vmul.f32 %v572, %v582
        %v596 = vmul.f32 %v573, %v582
        %v597 = vmul.f32 %v574, %v582
        %v598 = vmul.f32 %v575, %v582
        %v599 = vmul.f32 %v576, %v582
        %600 = vadd.xlane.f32.xlu0 %v584
        %v601 = vpop.xlane.xlu0 %600
        %602 = vadd.xlane.f32.xlu0 %v585
        %v603 = vpop.xlane.xlu0 %602
        %604 = vadd.xlane.f32.xlu0 %v586
        %v605 = vpop.xlane.xlu0 %604
        %606 = vadd.xlane.f32.xlu0 %v587
        %v607 = vpop.xlane.xlu0 %606
        %608 = vadd.xlane.f32.xlu0 %v588
        %v609 = vpop.xlane.xlu0 %608
        %610 = vadd.xlane.f32.xlu0 %v589
        %v611 = vpop.xlane.xlu0 %610
        %612 = vadd.xlane.f32.xlu0 %v590
        %v613 = vpop.xlane.xlu0 %612
        %614 = vadd.xlane.f32.xlu0 %v591
        %v615 = vpop.xlane.xlu0 %614
        %616 = vadd.xlane.f32.xlu0 %v592
        %v617 = vpop.xlane.xlu0 %616
        %618 = vadd.xlane.f32.xlu0 %v593
        %v619 = vpop.xlane.xlu0 %618
        %620 = vadd.xlane.f32.xlu0 %v594
        %v621 = vpop.xlane.xlu0 %620
        %622 = vadd.xlane.f32.xlu0 %v595
        %v623 = vpop.xlane.xlu0 %622
        %624 = vadd.xlane.f32.xlu0 %v596
        %v625 = vpop.xlane.xlu0 %624
        %626 = vadd.xlane.f32.xlu0 %v597
        %v627 = vpop.xlane.xlu0 %626
        %628 = vadd.xlane.f32.xlu0 %v598
        %v629 = vpop.xlane.xlu0 %628
        %630 = vadd.xlane.f32.xlu0 %v599
        %v631 = vpop.xlane.xlu0 %630
        %v632 = vld [vmem:[#allocation5] sm:$0x1]
        %v634 = vlaneseq
        %v635 = vshrl.u32 %v634, 7
        %v636 = vsub.s32 0, %v635
        %v637 = vrot.slane %v632, %v636
        %638 = vset.pattern.permute.xlu0 0
        %639 = vperm.xlu0 %638, %v637
        %v640 = vpop.permute.xlu0 %639
        %v642 = vadd.f32 %v601, %v640
        %v643 = vadd.f32 %v603, %v640
        %v644 = vadd.f32 %v605, %v640
        %v645 = vadd.f32 %v607, %v640
        %v646 = vadd.f32 %v609, %v640
        %v647 = vadd.f32 %v611, %v640
        %v648 = vadd.f32 %v613, %v640
        %v649 = vadd.f32 %v615, %v640
        %v650 = vadd.f32 %v617, %v640
        %v651 = vadd.f32 %v619, %v640
        %v652 = vadd.f32 %v621, %v640
        %v653 = vadd.f32 %v623, %v640
        %v654 = vadd.f32 %v625, %v640
        %v655 = vadd.f32 %v627, %v640
        %v656 = vadd.f32 %v629, %v640
        %v657 = vadd.f32 %v631, %v640
        %v658 = vld [vmem:[#allocation2] sm:$0xff]
        %v675 = vlaneseq
        %v676 = vand.u32 %v675, 127
        %v677 = vlaneseq
        %v678 = vshrl.u32 %v677, 7
        %v679 = vsub.s32 %v676, %v678
        %v680 = vrot.slane %v642, %v679
        %v681 = vadd.s32 %v676, 4294967288
        %v682 = vlaneseq
        %v683 = vshrl.u32 %v682, 7
        %v684 = vsub.s32 %v681, %v683
        %v685 = vrot.slane %v643, %v684
        %vm686 = vcmask 130112
        %v687 = vsel %vm686, %v685, %v680
        %v688 = vlaneseq
        %v689 = vshrl.u32 %v688, 7
        %v690 = vsub.s32 %v676, %v689
        %v691 = vrot.slane %v644, %v690
        %v692 = vlaneseq
        %v693 = vshrl.u32 %v692, 7
        %v694 = vsub.s32 %v681, %v693
        %v695 = vrot.slane %v645, %v694
        %v696 = vsel %vm686, %v695, %v691
        %v697 = vlaneseq
        %v698 = vshrl.u32 %v697, 7
        %v699 = vsub.s32 %v676, %v698
        %v700 = vrot.slane %v646, %v699
        %v701 = vlaneseq
        %v702 = vshrl.u32 %v701, 7
        %v703 = vsub.s32 %v681, %v702
        %v704 = vrot.slane %v647, %v703
        %v705 = vsel %vm686, %v704, %v700
        %v706 = vlaneseq
        %v707 = vshrl.u32 %v706, 7
        %v708 = vsub.s32 %v676, %v707
        %v709 = vrot.slane %v648, %v708
        %v710 = vlaneseq
        %v711 = vshrl.u32 %v710, 7
        %v712 = vsub.s32 %v681, %v711
        %v713 = vrot.slane %v649, %v712
        %v714 = vsel %vm686, %v713, %v709
        %v715 = vlaneseq
        %v716 = vshrl.u32 %v715, 7
        %v717 = vsub.s32 %v676, %v716
        %v718 = vrot.slane %v650, %v717
        %v719 = vlaneseq
        %v720 = vshrl.u32 %v719, 7
        %v721 = vsub.s32 %v681, %v720
        %v722 = vrot.slane %v651, %v721
        %v723 = vsel %vm686, %v722, %v718
        %v724 = vlaneseq
        %v725 = vshrl.u32 %v724, 7
        %v726 = vsub.s32 %v676, %v725
        %v727 = vrot.slane %v652, %v726
        %v728 = vlaneseq
        %v729 = vshrl.u32 %v728, 7
        %v730 = vsub.s32 %v681, %v729
        %v731 = vrot.slane %v653, %v730
        %v732 = vsel %vm686, %v731, %v727
        %v733 = vlaneseq
        %v734 = vshrl.u32 %v733, 7
        %v735 = vsub.s32 %v676, %v734
        %v736 = vrot.slane %v654, %v735
        %v737 = vlaneseq
        %v738 = vshrl.u32 %v737, 7
        %v739 = vsub.s32 %v681, %v738
        %v740 = vrot.slane %v655, %v739
        %v741 = vsel %vm686, %v740, %v736
        %v742 = vlaneseq
        %v743 = vshrl.u32 %v742, 7
        %v744 = vsub.s32 %v676, %v743
        %v745 = vrot.slane %v656, %v744
        %v746 = vlaneseq
        %v747 = vshrl.u32 %v746, 7
        %v748 = vsub.s32 %v681, %v747
        %v749 = vrot.slane %v657, %v748
        %v750 = vsel %vm686, %v749, %v745
        %vm751 = vcmask 1041409
        %v752 = vsel %vm751, %v696, %v687
        %vm753 = vcmask 1042434
        %v754 = vsel %vm753, %v705, %v752
        %vm755 = vcmask 1043459
        %v756 = vsel %vm755, %v714, %v754
        %vm757 = vcmask 1044484
        %v758 = vsel %vm757, %v723, %v756
        %vm759 = vcmask 1045509
        %v760 = vsel %vm759, %v732, %v758
        %vm761 = vcmask 1046534
        %v762 = vsel %vm761, %v741, %v760
        %vm763 = vcmask 1047559
        %v764 = vsel %vm763, %v750, %v762
        %vm766 = vcmask 130048
        %v767 = vsel %vm766, %v764, -inf
        %768 = vmax.xlane.f32.xlu0 %v767
        %v769 = vpop.xlane.xlu0 %768
        %v770 = vmax.f32 %v658, %v769
        %v771 = vsub.f32 %v658, %v770
        %v772 = vmul.f32 %v771, 1.442695
        %v773 = vpow.pop %v772
        %775 = vset.pattern.permute.xlu0 0
        %776 = vperm.xlu0 %775, %v770
        %v777 = vpop.permute.xlu0 %776
        %v778 = vlaneseq
        %v779 = vshrl.u32 %v778, 7
        %v780 = vsub.s32 0, %v779
        %v781 = vrot.slane %v777, %v780
        %v782 = vlaneseq
        %v783 = vshrl.u32 %v782, 7
        %v784 = vsub.s32 1, %v783
        %v785 = vrot.slane %v777, %v784
        %v786 = vlaneseq
        %v787 = vshrl.u32 %v786, 7
        %v788 = vsub.s32 2, %v787
        %v789 = vrot.slane %v777, %v788
        %v790 = vlaneseq
        %v791 = vshrl.u32 %v790, 7
        %v792 = vsub.s32 3, %v791
        %v793 = vrot.slane %v777, %v792
        %v794 = vlaneseq
        %v795 = vshrl.u32 %v794, 7
        %v796 = vsub.s32 4, %v795
        %v797 = vrot.slane %v777, %v796
        %v798 = vlaneseq
        %v799 = vshrl.u32 %v798, 7
        %v800 = vsub.s32 5, %v799
        %v801 = vrot.slane %v777, %v800
        %v802 = vlaneseq
        %v803 = vshrl.u32 %v802, 7
        %v804 = vsub.s32 6, %v803
        %v805 = vrot.slane %v777, %v804
        %v806 = vlaneseq
        %v807 = vshrl.u32 %v806, 7
        %v808 = vsub.s32 7, %v807
        %v809 = vrot.slane %v777, %v808
        %v818 = vsub.f32 %v642, %v781
        %v819 = vsub.f32 %v643, %v781
        %v820 = vsub.f32 %v644, %v785
        %v821 = vsub.f32 %v645, %v785
        %v822 = vsub.f32 %v646, %v789
        %v823 = vsub.f32 %v647, %v789
        %v824 = vsub.f32 %v648, %v793
        %v825 = vsub.f32 %v649, %v793
        %v826 = vsub.f32 %v650, %v797
        %v827 = vsub.f32 %v651, %v797
        %v828 = vsub.f32 %v652, %v801
        %v829 = vsub.f32 %v653, %v801
        %v830 = vsub.f32 %v654, %v805
        %v831 = vsub.f32 %v655, %v805
        %v832 = vsub.f32 %v656, %v809
        %v833 = vsub.f32 %v657, %v809
        %v834 = vmul.f32 %v818, 1.442695
        %v835 = vpow.pop %v834
        %v836 = vmul.f32 %v819, 1.442695
        %v837 = vpow.pop %v836
        %v838 = vmul.f32 %v820, 1.442695
        %v839 = vpow.pop %v838
        %v840 = vmul.f32 %v821, 1.442695
        %v841 = vpow.pop %v840
        %v842 = vmul.f32 %v822, 1.442695
        %v843 = vpow.pop %v842
        %v844 = vmul.f32 %v823, 1.442695
        %v845 = vpow.pop %v844
        %v846 = vmul.f32 %v824, 1.442695
        %v847 = vpow.pop %v846
        %v848 = vmul.f32 %v825, 1.442695
        %v849 = vpow.pop %v848
        %v850 = vmul.f32 %v826, 1.442695
        %v851 = vpow.pop %v850
        %v852 = vmul.f32 %v827, 1.442695
        %v853 = vpow.pop %v852
        %v854 = vmul.f32 %v828, 1.442695
        %v855 = vpow.pop %v854
        %v856 = vmul.f32 %v829, 1.442695
        %v857 = vpow.pop %v856
        %v858 = vmul.f32 %v830, 1.442695
        %v859 = vpow.pop %v858
        %v860 = vmul.f32 %v831, 1.442695
        %v861 = vpow.pop %v860
        %v862 = vmul.f32 %v832, 1.442695
        %v863 = vpow.pop %v862
        %v864 = vmul.f32 %v833, 1.442695
        %v865 = vpow.pop %v864
        %v866 = vld [vmem:[#allocation3] sm:$0xff]
        %v867 = vmul.f32 %v773, %v866
        %884 = vset.pattern.permute.xlu0 0
        %885 = vperm.xlu0 %884, %v835
        %v886 = vpop.permute.xlu0 %885
        %887 = vset.pattern.permute.xlu0 0
        %888 = vperm.xlu0 %887, %v837
        %v889 = vpop.permute.xlu0 %888
        %890 = vset.pattern.permute.xlu0 0
        %891 = vperm.xlu0 %890, %v839
        %v892 = vpop.permute.xlu0 %891
        %893 = vset.pattern.permute.xlu0 0
        %894 = vperm.xlu0 %893, %v841
        %v895 = vpop.permute.xlu0 %894
        %896 = vset.pattern.permute.xlu0 0
        %897 = vperm.xlu0 %896, %v843
        %v898 = vpop.permute.xlu0 %897
        %899 = vset.pattern.permute.xlu0 0
        %900 = vperm.xlu0 %899, %v845
        %v901 = vpop.permute.xlu0 %900
        %902 = vset.pattern.permute.xlu0 0
        %903 = vperm.xlu0 %902, %v847
        %v904 = vpop.permute.xlu0 %903
        %905 = vset.pattern.permute.xlu0 0
        %906 = vperm.xlu0 %905, %v849
        %v907 = vpop.permute.xlu0 %906
        %908 = vset.pattern.permute.xlu0 0
        %909 = vperm.xlu0 %908, %v851
        %v910 = vpop.permute.xlu0 %909
        %911 = vset.pattern.permute.xlu0 0
        %912 = vperm.xlu0 %911, %v853
        %v913 = vpop.permute.xlu0 %912
        %914 = vset.pattern.permute.xlu0 0
        %915 = vperm.xlu0 %914, %v855
        %v916 = vpop.permute.xlu0 %915
        %917 = vset.pattern.permute.xlu0 0
        %918 = vperm.xlu0 %917, %v857
        %v919 = vpop.permute.xlu0 %918
        %920 = vset.pattern.permute.xlu0 0
        %921 = vperm.xlu0 %920, %v859
        %v922 = vpop.permute.xlu0 %921
        %923 = vset.pattern.permute.xlu0 0
        %924 = vperm.xlu0 %923, %v861
        %v925 = vpop.permute.xlu0 %924
        %926 = vset.pattern.permute.xlu0 0
        %927 = vperm.xlu0 %926, %v863
        %v928 = vpop.permute.xlu0 %927
        %929 = vset.pattern.permute.xlu0 0
        %930 = vperm.xlu0 %929, %v865
        %v931 = vpop.permute.xlu0 %930
        %v932 = vlaneseq
        %v933 = vshrl.u32 %v932, 7
        %v934 = vsub.s32 %v676, %v933
        %v935 = vrot.slane %v886, %v934
        %v936 = vlaneseq
        %v937 = vshrl.u32 %v936, 7
        %v938 = vsub.s32 %v681, %v937
        %v939 = vrot.slane %v889, %v938
        %v940 = vsel %vm686, %v939, %v935
        %v941 = vlaneseq
        %v942 = vshrl.u32 %v941, 7
        %v943 = vsub.s32 %v676, %v942
        %v944 = vrot.slane %v892, %v943
        %v945 = vlaneseq
        %v946 = vshrl.u32 %v945, 7
        %v947 = vsub.s32 %v681, %v946
        %v948 = vrot.slane %v895, %v947
        %v949 = vsel %vm686, %v948, %v944
        %v950 = vlaneseq
        %v951 = vshrl.u32 %v950, 7
        %v952 = vsub.s32 %v676, %v951
        %v953 = vrot.slane %v898, %v952
        %v954 = vlaneseq
        %v955 = vshrl.u32 %v954, 7
        %v956 = vsub.s32 %v681, %v955
        %v957 = vrot.slane %v901, %v956
        %v958 = vsel %vm686, %v957, %v953
        %v959 = vlaneseq
        %v960 = vshrl.u32 %v959, 7
        %v961 = vsub.s32 %v676, %v960
        %v962 = vrot.slane %v904, %v961
        %v963 = vlaneseq
        %v964 = vshrl.u32 %v963, 7
        %v965 = vsub.s32 %v681, %v964
        %v966 = vrot.slane %v907, %v965
        %v967 = vsel %vm686, %v966, %v962
        %v968 = vlaneseq
        %v969 = vshrl.u32 %v968, 7
        %v970 = vsub.s32 %v676, %v969
        %v971 = vrot.slane %v910, %v970
        %v972 = vlaneseq
        %v973 = vshrl.u32 %v972, 7
        %v974 = vsub.s32 %v681, %v973
        %v975 = vrot.slane %v913, %v974
        %v976 = vsel %vm686, %v975, %v971
        %v977 = vlaneseq
        %v978 = vshrl.u32 %v977, 7
        %v979 = vsub.s32 %v676, %v978
        %v980 = vrot.slane %v916, %v979
        %v981 = vlaneseq
        %v982 = vshrl.u32 %v981, 7
        %v983 = vsub.s32 %v681, %v982
        %v984 = vrot.slane %v919, %v983
        %v985 = vsel %vm686, %v984, %v980
        %v986 = vlaneseq
        %v987 = vshrl.u32 %v986, 7
        %v988 = vsub.s32 %v676, %v987
        %v989 = vrot.slane %v922, %v988
        %v990 = vlaneseq
        %v991 = vshrl.u32 %v990, 7
        %v992 = vsub.s32 %v681, %v991
        %v993 = vrot.slane %v925, %v992
        %v994 = vsel %vm686, %v993, %v989
        %v995 = vlaneseq
        %v996 = vshrl.u32 %v995, 7
        %v997 = vsub.s32 %v676, %v996
        %v998 = vrot.slane %v928, %v997
        %v999 = vlaneseq
        %v1000 = vshrl.u32 %v999, 7
        %v1001 = vsub.s32 %v681, %v1000
        %v1002 = vrot.slane %v931, %v1001
        %v1003 = vsel %vm686, %v1002, %v998
        %v1004 = vsel %vm751, %v949, %v940
        %v1005 = vsel %vm753, %v958, %v1004
        %v1006 = vsel %vm755, %v967, %v1005
        %v1007 = vsel %vm757, %v976, %v1006
        %v1008 = vsel %vm759, %v985, %v1007
        %v1009 = vsel %vm761, %v994, %v1008
        %v1010 = vsel %vm763, %v1003, %v1009
        %v1012 = vsel %vm766, %v1010, 0.0
        %1013 = vadd.xlane.f32.xlu0 %v1012
        %v1014 = vpop.xlane.xlu0 %1013
        %v1015 = vadd.f32 %v867, %v1014
        %vm1016 = vcmask 7168
        %1017 = vst.msk [vmem:[#allocation3] sm:$0xff] %vm1016, %v1015
        %v1018 = vld [vmem:[#allocation4] sm:$0xff]
        %1020 = vset.pattern.permute.xlu0 0
        %1021 = vperm.xlu0 %1020, %v773
        %v1022 = vpop.permute.xlu0 %1021
        %v1024 = vmul.f32 %v1022, %v1018
        %v1041 = vmul.f32 %v886, %v561
        %v1042 = vmul.f32 %v889, %v562
        %v1043 = vmul.f32 %v892, %v563
        %v1044 = vmul.f32 %v895, %v564
        %v1045 = vmul.f32 %v898, %v565
        %v1046 = vmul.f32 %v901, %v566
        %v1047 = vmul.f32 %v904, %v567
        %v1048 = vmul.f32 %v907, %v568
        %v1049 = vmul.f32 %v910, %v569
        %v1050 = vmul.f32 %v913, %v570
        %v1051 = vmul.f32 %v916, %v571
        %v1052 = vmul.f32 %v919, %v572
        %v1053 = vmul.f32 %v922, %v573
        %v1054 = vmul.f32 %v925, %v574
        %v1055 = vmul.f32 %v928, %v575
        %v1056 = vmul.f32 %v931, %v576
        %v1057 = vadd.f32 %v1041, %v1042
        %v1058 = vrot.slane %v1057, 4
        %v1059 = vadd.f32 %v1057, %v1058
        %v1060 = vrot.slane %v1059, 2
        %v1061 = vadd.f32 %v1059, %v1060
        %v1062 = vrot.slane %v1061, 1
        %v1063 = vadd.f32 %v1061, %v1062
        %v1064 = vadd.f32 %v1043, %v1044
        %v1065 = vrot.slane %v1064, 4
        %v1066 = vadd.f32 %v1064, %v1065
        %v1067 = vrot.slane %v1066, 2
        %v1068 = vadd.f32 %v1066, %v1067
        %v1069 = vrot.slane %v1068, 1
        %v1070 = vadd.f32 %v1068, %v1069
        %v1071 = vadd.f32 %v1045, %v1046
        %v1072 = vrot.slane %v1071, 4
        %v1073 = vadd.f32 %v1071, %v1072
        %v1074 = vrot.slane %v1073, 2
        %v1075 = vadd.f32 %v1073, %v1074
        %v1076 = vrot.slane %v1075, 1
        %v1077 = vadd.f32 %v1075, %v1076
        %v1078 = vadd.f32 %v1047, %v1048
        %v1079 = vrot.slane %v1078, 4
        %v1080 = vadd.f32 %v1078, %v1079
        %v1081 = vrot.slane %v1080, 2
        %v1082 = vadd.f32 %v1080, %v1081
        %v1083 = vrot.slane %v1082, 1
        %v1084 = vadd.f32 %v1082, %v1083
        %v1085 = vadd.f32 %v1049, %v1050
        %v1086 = vrot.slane %v1085, 4
        %v1087 = vadd.f32 %v1085, %v1086
        %v1088 = vrot.slane %v1087, 2
        %v1089 = vadd.f32 %v1087, %v1088
        %v1090 = vrot.slane %v1089, 1
        %v1091 = vadd.f32 %v1089, %v1090
        %v1092 = vadd.f32 %v1051, %v1052
        %v1093 = vrot.slane %v1092, 4
        %v1094 = vadd.f32 %v1092, %v1093
        %v1095 = vrot.slane %v1094, 2
        %v1096 = vadd.f32 %v1094, %v1095
        %v1097 = vrot.slane %v1096, 1
        %v1098 = vadd.f32 %v1096, %v1097
        %v1099 = vadd.f32 %v1053, %v1054
        %v1100 = vrot.slane %v1099, 4
        %v1101 = vadd.f32 %v1099, %v1100
        %v1102 = vrot.slane %v1101, 2
        %v1103 = vadd.f32 %v1101, %v1102
        %v1104 = vrot.slane %v1103, 1
        %v1105 = vadd.f32 %v1103, %v1104
        %v1106 = vadd.f32 %v1055, %v1056
        %v1107 = vrot.slane %v1106, 4
        %v1108 = vadd.f32 %v1106, %v1107
        %v1109 = vrot.slane %v1108, 2
        %v1110 = vadd.f32 %v1108, %v1109
        %v1111 = vrot.slane %v1110, 1
        %v1112 = vadd.f32 %v1110, %v1111
        %v1121 = vsel %vm751, %v1070, %v1063
        %v1122 = vsel %vm753, %v1077, %v1121
        %v1123 = vsel %vm755, %v1084, %v1122
        %v1124 = vsel %vm757, %v1091, %v1123
        %v1125 = vsel %vm759, %v1098, %v1124
        %v1126 = vsel %vm761, %v1105, %v1125
        %v1127 = vsel %vm763, %v1112, %v1126
        %v1129 = vadd.f32 %v1024, %v1127
        %1130 = vst [vmem:[#allocation4] sm:$0xff] %v1129
        %1131 = vst.msk [vmem:[#allocation2] sm:$0xff] %vm1016, %v770
        %p1132 = scmp.eq.s32.totalorder %s38, 1
        // Predicated region
        $region93: #{tpu_custom_call.1} parent=67 // pred_check
          %p1133 = pneg %p1132
        $region94: #{tpu_custom_call.1} parent=67 // pred_check_branch
          %1135 = sbr.rel (%p1133) target = $region96
        $region95: #{tpu_custom_call.1} parent=67 // pred_region
          %v1136 = vld [vmem:[#allocation3] sm:$0xff]
          %v1137 = vrcp.pop %v1136
          %v1138 = vld [vmem:[#allocation4] sm:$0xff]
          %1140 = vset.pattern.permute.xlu0 0
          %1141 = vperm.xlu0 %1140, %v1137
          %v1142 = vpop.permute.xlu0 %1141
          %v1144 = vmul.f32 %v1138, %v1142
          %v1145 = vld [vmem:[#allocation9] sm:$0xff]
          %v1146 = vld [vmem:[#allocation9 + $0x8] sm:$0xff]
          %v1147 = vld [vmem:[#allocation9 + $0x10] sm:$0xff]
          %v1148 = vld [vmem:[#allocation9 + $0x18] sm:$0xff]
          %v1149 = vld [vmem:[#allocation9 + $0x20] sm:$0xff]
          %v1150 = vld [vmem:[#allocation9 + $0x28] sm:$0xff]
          %v1151 = vld [vmem:[#allocation9 + $0x30] sm:$0xff]
          %v1152 = vld [vmem:[#allocation9 + $0x38] sm:$0xff]
          %v1153 = vld [vmem:[#allocation9 + $0x40] sm:$0xff]
          %v1154 = vld [vmem:[#allocation9 + $0x48] sm:$0xff]
          %v1155 = vld [vmem:[#allocation9 + $0x50] sm:$0xff]
          %v1156 = vld [vmem:[#allocation9 + $0x58] sm:$0xff]
          %v1157 = vld [vmem:[#allocation9 + $0x60] sm:$0xff]
          %v1158 = vld [vmem:[#allocation9 + $0x68] sm:$0xff]
          %v1159 = vld [vmem:[#allocation9 + $0x70] sm:$0xff]
          %v1160 = vld [vmem:[#allocation9 + $0x78] sm:$0xff]
          %v1161 = vld [vmem:[%s4] sm:$0x1]
          %v1163 = vlaneseq
          %v1164 = vshrl.u32 %v1163, 7
          %v1165 = vsub.s32 0, %v1164
          %v1166 = vrot.slane %v1161, %v1165
          %1168 = vmatprep.subr.mxu0 0.0
          %1169 = vmatpush1.msra.mxu0 %v1145
          %1170 = vmatprep.subr.mxu0 0.0
          %1171 = vmatpush1.msra.mxu0 %v1146
          %1172 = vmatprep.subr.mxu0 0.0
          %1173 = vmatpush1.msra.mxu0 %v1147
          %1174 = vmatprep.subr.mxu0 0.0
          %1175 = vmatpush1.msra.mxu0 %v1148
          %1176 = vmatprep.subr.mxu0 0.0
          %1177 = vmatpush1.msra.mxu0 %v1149
          %1178 = vmatprep.subr.mxu0 0.0
          %1179 = vmatpush1.msra.mxu0 %v1150
          %1180 = vmatprep.subr.mxu0 0.0
          %1181 = vmatpush1.msra.mxu0 %v1151
          %1182 = vmatprep.subr.mxu0 0.0
          %1183 = vmatpush1.msra.mxu0 %v1152
          %1184 = vmatprep.subr.mxu0 0.0
          %1185 = vmatpush1.msra.mxu0 %v1153
          %1186 = vmatprep.subr.mxu0 0.0
          %1187 = vmatpush1.msra.mxu0 %v1154
          %1188 = vmatprep.subr.mxu0 0.0
          %1189 = vmatpush1.msra.mxu0 %v1155
          %1190 = vmatprep.subr.mxu0 0.0
          %1191 = vmatpush1.msra.mxu0 %v1156
          %1192 = vmatprep.subr.mxu0 0.0
          %1193 = vmatpush1.msra.mxu0 %v1157
          %1194 = vmatprep.subr.mxu0 0.0
          %1195 = vmatpush1.msra.mxu0 %v1158
          %1196 = vmatprep.subr.mxu0 0.0
          %1197 = vmatpush1.msra.mxu0 %v1159
          %1198 = vmatprep.subr.mxu0 0.0
          %1199 = vmatpush1.msra.mxu0 %v1160
          %1200 = vmatprep.subr.mxu0 0.0
          %1201 = vmatpush1.msra.mxu0 0.0
          %1202 = vmatprep.subr.mxu0 0.0
          %1203 = vmatpush1.msra.mxu0 0.0
          %1204 = vmatprep.subr.mxu0 0.0
          %1205 = vmatpush1.msra.mxu0 0.0
          %1206 = vmatprep.subr.mxu0 0.0
          %1207 = vmatpush1.msra.mxu0 0.0
          %1208 = vmatprep.subr.mxu0 0.0
          %1209 = vmatpush1.msra.mxu0 0.0
          %1210 = vmatprep.subr.mxu0 0.0
          %1211 = vmatpush1.msra.mxu0 0.0
          %1212 = vmatprep.subr.mxu0 0.0
          %1213 = vmatpush1.msra.mxu0 0.0
          %1214 = vmatprep.subr.mxu0 0.0
          %1215 = vmatpush1.msra.mxu0 0.0
          %1216 = vmatprep.subr.mxu0 0.0
          %1217 = vmatpush1.msra.mxu0 0.0
          %1218 = vmatprep.subr.mxu0 0.0
          %1219 = vmatpush1.msra.mxu0 0.0
          %1220 = vmatprep.subr.mxu0 0.0
          %1221 = vmatpush1.msra.mxu0 0.0
          %1222 = vmatprep.subr.mxu0 0.0
          %1223 = vmatpush1.msra.mxu0 0.0
          %1224 = vmatprep.subr.mxu0 0.0
          %1225 = vmatpush1.msra.mxu0 0.0
          %1226 = vmatprep.subr.mxu0 0.0
          %1227 = vmatpush1.msra.mxu0 0.0
          %1228 = vmatprep.subr.mxu0 0.0
          %1229 = vmatpush1.msra.mxu0 0.0
          %1230 = vmatprep.subr.mxu0 0.0
          %1231 = vmatpush1.msra.mxu0 0.0
          %1232 = vmatprep.mubr.f32.mxu0 0.0
          %1233 = vmatmul.mubr.f32.gmra.mrb[0].mxu0 %v1144
          %v1234 = vpop.f32.mrb[0].mxu0
          %v1235 = vadd.f32 %v1166, %v1234
          %v1236 = vpop.f32.mrb[0].mxu0
          %1237 = vdwg.mxu0
          %v1238 = vld [vmem:[#allocation11] sm:$0xff]
          %v1239 = vld [vmem:[#allocation11 + $0x8] sm:$0xff]
          %v1240 = vld [vmem:[#allocation11 + $0x10] sm:$0xff]
          %v1241 = vld [vmem:[#allocation11 + $0x18] sm:$0xff]
          %v1242 = vld [vmem:[#allocation11 + $0x20] sm:$0xff]
          %v1243 = vld [vmem:[#allocation11 + $0x28] sm:$0xff]
          %v1244 = vld [vmem:[#allocation11 + $0x30] sm:$0xff]
          %v1245 = vld [vmem:[#allocation11 + $0x38] sm:$0xff]
          %v1246 = vld [vmem:[#allocation11 + $0x40] sm:$0xff]
          %v1247 = vld [vmem:[#allocation11 + $0x48] sm:$0xff]
          %v1248 = vld [vmem:[#allocation11 + $0x50] sm:$0xff]
          %v1249 = vld [vmem:[#allocation11 + $0x58] sm:$0xff]
          %v1250 = vld [vmem:[#allocation11 + $0x60] sm:$0xff]
          %v1251 = vld [vmem:[#allocation11 + $0x68] sm:$0xff]
          %v1252 = vld [vmem:[#allocation11 + $0x70] sm:$0xff]
          %v1253 = vld [vmem:[#allocation11 + $0x78] sm:$0xff]
          %v1254 = vld [vmem:[%s6] sm:$0x1]
          %v1256 = vlaneseq
          %v1257 = vshrl.u32 %v1256, 7
          %v1258 = vsub.s32 0, %v1257
          %v1259 = vrot.slane %v1254, %v1258
          %1261 = vmatprep.subr.mxu0 0.0
          %1262 = vmatpush1.msra.mxu0 %v1238
          %1263 = vmatprep.subr.mxu0 0.0
          %1264 = vmatpush1.msra.mxu0 %v1239
          %1265 = vmatprep.subr.mxu0 0.0
          %1266 = vmatpush1.msra.mxu0 %v1240
          %1267 = vmatprep.subr.mxu0 0.0
          %1268 = vmatpush1.msra.mxu0 %v1241
          %1269 = vmatprep.subr.mxu0 0.0
          %1270 = vmatpush1.msra.mxu0 %v1242
          %1271 = vmatprep.subr.mxu0 0.0
          %1272 = vmatpush1.msra.mxu0 %v1243
          %1273 = vmatprep.subr.mxu0 0.0
          %1274 = vmatpush1.msra.mxu0 %v1244
          %1275 = vmatprep.subr.mxu0 0.0
          %1276 = vmatpush1.msra.mxu0 %v1245
          %1277 = vmatprep.subr.mxu0 0.0
          %1278 = vmatpush1.msra.mxu0 %v1246
          %1279 = vmatprep.subr.mxu0 0.0
          %1280 = vmatpush1.msra.mxu0 %v1247
          %1281 = vmatprep.subr.mxu0 0.0
          %1282 = vmatpush1.msra.mxu0 %v1248
          %1283 = vmatprep.subr.mxu0 0.0
          %1284 = vmatpush1.msra.mxu0 %v1249
          %1285 = vmatprep.subr.mxu0 0.0
          %1286 = vmatpush1.msra.mxu0 %v1250
          %1287 = vmatprep.subr.mxu0 0.0
          %1288 = vmatpush1.msra.mxu0 %v1251
          %1289 = vmatprep.subr.mxu0 0.0
          %1290 = vmatpush1.msra.mxu0 %v1252
          %1291 = vmatprep.subr.mxu0 0.0
          %1292 = vmatpush1.msra.mxu0 %v1253
          %1293 = vmatprep.subr.mxu0 0.0
          %1294 = vmatpush1.msra.mxu0 0.0
          %1295 = vmatprep.subr.mxu0 0.0
          %1296 = vmatpush1.msra.mxu0 0.0
          %1297 = vmatprep.subr.mxu0 0.0
          %1298 = vmatpush1.msra.mxu0 0.0
          %1299 = vmatprep.subr.mxu0 0.0
          %1300 = vmatpush1.msra.mxu0 0.0
          %1301 = vmatprep.subr.mxu0 0.0
          %1302 = vmatpush1.msra.mxu0 0.0
          %1303 = vmatprep.subr.mxu0 0.0
          %1304 = vmatpush1.msra.mxu0 0.0
          %1305 = vmatprep.subr.mxu0 0.0
          %1306 = vmatpush1.msra.mxu0 0.0
          %1307 = vmatprep.subr.mxu0 0.0
          %1308 = vmatpush1.msra.mxu0 0.0
          %1309 = vmatprep.subr.mxu0 0.0
          %1310 = vmatpush1.msra.mxu0 0.0
          %1311 = vmatprep.subr.mxu0 0.0
          %1312 = vmatpush1.msra.mxu0 0.0
          %1313 = vmatprep.subr.mxu0 0.0
          %1314 = vmatpush1.msra.mxu0 0.0
          %1315 = vmatprep.subr.mxu0 0.0
          %1316 = vmatpush1.msra.mxu0 0.0
          %1317 = vmatprep.subr.mxu0 0.0
          %1318 = vmatpush1.msra.mxu0 0.0
          %1319 = vmatprep.subr.mxu0 0.0
          %1320 = vmatpush1.msra.mxu0 0.0
          %1321 = vmatprep.subr.mxu0 0.0
          %1322 = vmatpush1.msra.mxu0 0.0
          %1323 = vmatprep.subr.mxu0 0.0
          %1324 = vmatpush1.msra.mxu0 0.0
          %1325 = vmatprep.mubr.f32.mxu0 0.0
          %1326 = vmatmul.mubr.f32.gmra.mrb[0].mxu0 %v1235
          %v1327 = vpop.f32.mrb[0].mxu0
          %v1328 = vadd.f32 %v1259, %v1327
          %v1329 = vpop.f32.mrb[0].mxu0
          %1330 = vdwg.mxu0
          %v1331 = vmax.f32 %v1328, 0.0
          %v1332 = vld [vmem:[#allocation12] sm:$0xff]
          %v1333 = vld [vmem:[#allocation12 + $0x8] sm:$0xff]
          %v1334 = vld [vmem:[#allocation12 + $0x10] sm:$0xff]
          %v1335 = vld [vmem:[#allocation12 + $0x18] sm:$0xff]
          %v1336 = vld [vmem:[#allocation12 + $0x20] sm:$0xff]
          %v1337 = vld [vmem:[#allocation12 + $0x28] sm:$0xff]
          %v1338 = vld [vmem:[#allocation12 + $0x30] sm:$0xff]
          %v1339 = vld [vmem:[#allocation12 + $0x38] sm:$0xff]
          %v1340 = vld [vmem:[#allocation12 + $0x40] sm:$0xff]
          %v1341 = vld [vmem:[#allocation12 + $0x48] sm:$0xff]
          %v1342 = vld [vmem:[#allocation12 + $0x50] sm:$0xff]
          %v1343 = vld [vmem:[#allocation12 + $0x58] sm:$0xff]
          %v1344 = vld [vmem:[#allocation12 + $0x60] sm:$0xff]
          %v1345 = vld [vmem:[#allocation12 + $0x68] sm:$0xff]
          %v1346 = vld [vmem:[#allocation12 + $0x70] sm:$0xff]
          %v1347 = vld [vmem:[#allocation12 + $0x78] sm:$0xff]
          %v1348 = vld [vmem:[%s8] sm:$0x1]
          %v1350 = vlaneseq
          %v1351 = vshrl.u32 %v1350, 7
          %v1352 = vsub.s32 0, %v1351
          %v1353 = vrot.slane %v1348, %v1352
          %1355 = vmatprep.subr.mxu0 0.0
          %1356 = vmatpush1.msra.mxu0 %v1332
          %1357 = vmatprep.subr.mxu0 0.0
          %1358 = vmatpush1.msra.mxu0 %v1333
          %1359 = vmatprep.subr.mxu0 0.0
          %1360 = vmatpush1.msra.mxu0 %v1334
          %1361 = vmatprep.subr.mxu0 0.0
          %1362 = vmatpush1.msra.mxu0 %v1335
          %1363 = vmatprep.subr.mxu0 0.0
          %1364 = vmatpush1.msra.mxu0 %v1336
          %1365 = vmatprep.subr.mxu0 0.0
          %1366 = vmatpush1.msra.mxu0 %v1337
          %1367 = vmatprep.subr.mxu0 0.0
          %1368 = vmatpush1.msra.mxu0 %v1338
          %1369 = vmatprep.subr.mxu0 0.0
          %1370 = vmatpush1.msra.mxu0 %v1339
          %1371 = vmatprep.subr.mxu0 0.0
          %1372 = vmatpush1.msra.mxu0 %v1340
          %1373 = vmatprep.subr.mxu0 0.0
          %1374 = vmatpush1.msra.mxu0 %v1341
          %1375 = vmatprep.subr.mxu0 0.0
          %1376 = vmatpush1.msra.mxu0 %v1342
          %1377 = vmatprep.subr.mxu0 0.0
          %1378 = vmatpush1.msra.mxu0 %v1343
          %1379 = vmatprep.subr.mxu0 0.0
          %1380 = vmatpush1.msra.mxu0 %v1344
          %1381 = vmatprep.subr.mxu0 0.0
          %1382 = vmatpush1.msra.mxu0 %v1345
          %1383 = vmatprep.subr.mxu0 0.0
          %1384 = vmatpush1.msra.mxu0 %v1346
          %1385 = vmatprep.subr.mxu0 0.0
          %1386 = vmatpush1.msra.mxu0 %v1347
          %1387 = vmatprep.subr.mxu0 0.0
          %1388 = vmatpush1.msra.mxu0 0.0
          %1389 = vmatprep.subr.mxu0 0.0
          %1390 = vmatpush1.msra.mxu0 0.0
          %1391 = vmatprep.subr.mxu0 0.0
          %1392 = vmatpush1.msra.mxu0 0.0
          %1393 = vmatprep.subr.mxu0 0.0
          %1394 = vmatpush1.msra.mxu0 0.0
          %1395 = vmatprep.subr.mxu0 0.0
          %1396 = vmatpush1.msra.mxu0 0.0
          %1397 = vmatprep.subr.mxu0 0.0
          %1398 = vmatpush1.msra.mxu0 0.0
          %1399 = vmatprep.subr.mxu0 0.0
          %1400 = vmatpush1.msra.mxu0 0.0
          %1401 = vmatprep.subr.mxu0 0.0
          %1402 = vmatpush1.msra.mxu0 0.0
          %1403 = vmatprep.subr.mxu0 0.0
          %1404 = vmatpush1.msra.mxu0 0.0
          %1405 = vmatprep.subr.mxu0 0.0
          %1406 = vmatpush1.msra.mxu0 0.0
          %1407 = vmatprep.subr.mxu0 0.0
          %1408 = vmatpush1.msra.mxu0 0.0
          %1409 = vmatprep.subr.mxu0 0.0
          %1410 = vmatpush1.msra.mxu0 0.0
          %1411 = vmatprep.subr.mxu0 0.0
          %1412 = vmatpush1.msra.mxu0 0.0
          %1413 = vmatprep.subr.mxu0 0.0
          %1414 = vmatpush1.msra.mxu0 0.0
          %1415 = vmatprep.subr.mxu0 0.0
          %1416 = vmatpush1.msra.mxu0 0.0
          %1417 = vmatprep.subr.mxu0 0.0
          %1418 = vmatpush1.msra.mxu0 0.0
          %1419 = vmatprep.mubr.f32.mxu0 0.0
          %1420 = vmatmul.mubr.f32.gmra.mrb[0].mxu0 %v1331
          %v1421 = vpop.f32.mrb[0].mxu0
          %v1422 = vadd.f32 %v1353, %v1421
          %v1423 = vpop.f32.mrb[0].mxu0
          %1424 = vdwg.mxu0
          %v1425 = vmax.f32 %v1422, 0.0
          %v1426 = vld [vmem:[#allocation14] sm:$0xff]
          %v1427 = vld [vmem:[#allocation14 + $0x8] sm:$0xff]
          %v1428 = vld [vmem:[#allocation14 + $0x10] sm:$0xff]
          %v1429 = vld [vmem:[#allocation14 + $0x18] sm:$0xff]
          %v1430 = vld [vmem:[#allocation14 + $0x20] sm:$0xff]
          %v1431 = vld [vmem:[#allocation14 + $0x28] sm:$0xff]
          %v1432 = vld [vmem:[#allocation14 + $0x30] sm:$0xff]
          %v1433 = vld [vmem:[#allocation14 + $0x38] sm:$0xff]
          %v1434 = vld [vmem:[#allocation14 + $0x40] sm:$0xff]
          %v1435 = vld [vmem:[#allocation14 + $0x48] sm:$0xff]
          %v1436 = vld [vmem:[#allocation14 + $0x50] sm:$0xff]
          %v1437 = vld [vmem:[#allocation14 + $0x58] sm:$0xff]
          %v1438 = vld [vmem:[#allocation14 + $0x60] sm:$0xff]
          %v1439 = vld [vmem:[#allocation14 + $0x68] sm:$0xff]
          %v1440 = vld [vmem:[#allocation14 + $0x70] sm:$0xff]
          %v1441 = vld [vmem:[#allocation14 + $0x78] sm:$0xff]
          %v1442 = vld [vmem:[%s10] sm:$0x1]
          %v1444 = vlaneseq
          %v1445 = vshrl.u32 %v1444, 7
          %v1446 = vsub.s32 0, %v1445
          %v1447 = vrot.slane %v1442, %v1446
          %1449 = vmatprep.subr.mxu0 0.0
          %1450 = vmatpush1.msra.mxu0 %v1426
          %1451 = vmatprep.subr.mxu0 0.0
          %1452 = vmatpush1.msra.mxu0 %v1427
          %1453 = vmatprep.subr.mxu0 0.0
          %1454 = vmatpush1.msra.mxu0 %v1428
          %1455 = vmatprep.subr.mxu0 0.0
          %1456 = vmatpush1.msra.mxu0 %v1429
          %1457 = vmatprep.subr.mxu0 0.0
          %1458 = vmatpush1.msra.mxu0 %v1430
          %1459 = vmatprep.subr.mxu0 0.0
          %1460 = vmatpush1.msra.mxu0 %v1431
          %1461 = vmatprep.subr.mxu0 0.0
          %1462 = vmatpush1.msra.mxu0 %v1432
          %1463 = vmatprep.subr.mxu0 0.0
          %1464 = vmatpush1.msra.mxu0 %v1433
          %1465 = vmatprep.subr.mxu0 0.0
          %1466 = vmatpush1.msra.mxu0 %v1434
          %1467 = vmatprep.subr.mxu0 0.0
          %1468 = vmatpush1.msra.mxu0 %v1435
          %1469 = vmatprep.subr.mxu0 0.0
          %1470 = vmatpush1.msra.mxu0 %v1436
          %1471 = vmatprep.subr.mxu0 0.0
          %1472 = vmatpush1.msra.mxu0 %v1437
          %1473 = vmatprep.subr.mxu0 0.0
          %1474 = vmatpush1.msra.mxu0 %v1438
          %1475 = vmatprep.subr.mxu0 0.0
          %1476 = vmatpush1.msra.mxu0 %v1439
          %1477 = vmatprep.subr.mxu0 0.0
          %1478 = vmatpush1.msra.mxu0 %v1440
          %1479 = vmatprep.subr.mxu0 0.0
          %1480 = vmatpush1.msra.mxu0 %v1441
          %1481 = vmatprep.subr.mxu0 0.0
          %1482 = vmatpush1.msra.mxu0 0.0
          %1483 = vmatprep.subr.mxu0 0.0
          %1484 = vmatpush1.msra.mxu0 0.0
          %1485 = vmatprep.subr.mxu0 0.0
          %1486 = vmatpush1.msra.mxu0 0.0
          %1487 = vmatprep.subr.mxu0 0.0
          %1488 = vmatpush1.msra.mxu0 0.0
          %1489 = vmatprep.subr.mxu0 0.0
          %1490 = vmatpush1.msra.mxu0 0.0
          %1491 = vmatprep.subr.mxu0 0.0
          %1492 = vmatpush1.msra.mxu0 0.0
          %1493 = vmatprep.subr.mxu0 0.0
          %1494 = vmatpush1.msra.mxu0 0.0
          %1495 = vmatprep.subr.mxu0 0.0
          %1496 = vmatpush1.msra.mxu0 0.0
          %1497 = vmatprep.subr.mxu0 0.0
          %1498 = vmatpush1.msra.mxu0 0.0
          %1499 = vmatprep.subr.mxu0 0.0
          %1500 = vmatpush1.msra.mxu0 0.0
          %1501 = vmatprep.subr.mxu0 0.0
          %1502 = vmatpush1.msra.mxu0 0.0
          %1503 = vmatprep.subr.mxu0 0.0
          %1504 = vmatpush1.msra.mxu0 0.0
          %1505 = vmatprep.subr.mxu0 0.0
          %1506 = vmatpush1.msra.mxu0 0.0
          %1507 = vmatprep.subr.mxu0 0.0
          %1508 = vmatpush1.msra.mxu0 0.0
          %1509 = vmatprep.subr.mxu0 0.0
          %1510 = vmatpush1.msra.mxu0 0.0
          %1511 = vmatprep.subr.mxu0 0.0
          %1512 = vmatpush1.msra.mxu0 0.0
          %1513 = vmatprep.mubr.f32.mxu0 0.0
          %1514 = vmatmul.mubr.f32.gmra.mrb[0].mxu0 %v1425
          %v1515 = vpop.f32.mrb[0].mxu0
          %v1516 = vadd.f32 %v1447, %v1515
          %v1517 = vpop.f32.mrb[0].mxu0
          %1518 = vdwg.mxu0
          %1519 = vmax.xlane.f32.xlu0 %v1516
          %v1520 = vpop.xlane.xlu0 %1519
          %v1521 = vsub.f32 %v1516, %v1520
          %v1522 = vmul.f32 %v1521, 1.442695
          %v1523 = vpow.pop %v1522
          %1524 = vadd.xlane.f32.xlu0 %v1523
          %v1525 = vpop.xlane.xlu0 %1524
          %v1526 = vlog2.pop %v1525
          %v1527 = vmul.f32 %v1526, 0.6931472
          %v1528 = vadd.f32 %v1527, %v1520
          %v1529 = vld [vmem:[%s552] sm:$0xff]
          %1530 = vset.pattern.permute.xlu0 0
          %1531 = vperm.xlu0 %1530, %v1529
          %v1532 = vpop.permute.xlu0 %1531
          %vm1533 = vcmp.eq.s32.totalorder %v676, %v1532
          %v1534 = vsel %vm1533, %v1516, 0.0
          %1535 = vadd.xlane.f32.xlu0 %v1534
          %v1536 = vpop.xlane.xlu0 %1535
          %v1537 = vsub.f32 %v1528, %v1536
          %1538 = vst [vmem:[%s546] sm:$0xff] %v1537
        $region96: #{tpu_custom_call.1} parent=67 // pred_fallthru
          _
        %s1539 = sand.u32 %s317, 1
        %s1540 = scalar_lea.sflag [#allocation8], %s1539
        %s1541 = sand.u32 %s317, 1
        %s1542 = smul.addr %s1541, 8
        %s1543 = scalar_lea.vmem [#allocation15], %s1542
        // Predicated region
        $region97: #{tpu_custom_call.1} parent=67 // pred_check
          %p1544 = pneg %p327
        $region98: #{tpu_custom_call.1} parent=67 // pred_check_branch
          %1546 = sbr.rel (%p1544) target = $region100
        $region99: #{tpu_custom_call.1} parent=67 // pred_region
          %s1548 = ssub.s32 128, 128
          %1549 = vsyncadd %s1540, %s1548
          %s1550 = smul.addr %s37, 128
          %s1551 = scalar_lea.hbm %s12, %s1550
          %s1553 = sshll.u32 %s1543, 4
          %s1554 = int_to_ptr.vmem [resolvable:$true] %s1553
          %1556 = dma.vmem_to_hbm [thread:$0]  %s1554, 128, %s1551, %s1540
        $region100: #{tpu_custom_call.1} parent=67 // pred_fallthru
          _
      $region68: #{tpu_custom_call.1} parent=5 // pred_fallthru
        _
      %p1557 = scmp.le.s32.totalorder 2, %s28
      // Predicated region
      $region101: #{tpu_custom_call.1} parent=5 // pred_check
        %p1558 = pneg %p1557
      $region102: #{tpu_custom_call.1} parent=5 // pred_check_branch
        %1560 = sbr.rel (%p1558) target = $region104
      $region103: #{tpu_custom_call.1} parent=5 // pred_region
        %s1561 = ssub.s32 %s28, 2
        // Predicated region
        $region105: #{tpu_custom_call.1} parent=103 // pred_check
          %p1562 = pneg %p333
        $region106: #{tpu_custom_call.1} parent=103 // pred_check_branch
          %1564 = sbr.rel (%p1562) target = $region108
        $region107: #{tpu_custom_call.1} parent=103 // pred_region
          %s1565 = sand.u32 %s318, 1
          %s1566 = scalar_lea.sflag [#allocation8], %s1565
          %s1567 = sand.u32 %s318, 1
          %s1568 = smul.addr %s1567, 8
          %s1569 = scalar_lea.vmem [#allocation15], %s1568
          %1570 = dma.done %s1566, 128
        $region108: #{tpu_custom_call.1} parent=103 // pred_fallthru
          _
      $region104: #{tpu_custom_call.1} parent=5 // pred_fallthru
        _
    $region6: #{tpu_custom_call.1} parent=1 // loop_footer
      %s32 = sadd.s32 1, %s28
    $region7: #{tpu_custom_call.1} parent=1 // loop_footer_branch
      %27 = sbr.rel target = $region3
    $region8: #{tpu_custom_call.1} parent=1 // loop_exit
      _
    %1571 = vsyncpa [#allocation7], 1
    %s1572 = scalar_lea.sflag [#allocation7], 1
    %1573 = vsyncpa %s1572, 1
    %1574 = vsyncpa [#allocation10], 1
    %1575 = vsyncpa [#allocation13], 1
    %1576 = vsyncpa [#allocation8], 1
    %s1577 = scalar_lea.sflag [#allocation8], 1
    %1578 = vsyncpa %s1577, 1

</llo_original>
